<compile_context>
chip_gen: v7x
topology: tpu7x:2x2x1
jax: 0.10.0
libtpu: 0.0.40
codegen_flags: <defaults>
</compile_context>

<pallas_src>
import functools

import jax
import jax.numpy as jnp
from jax import lax
from jax.experimental import pallas as pl
from jax.experimental.pallas import tpu as pltpu


_INV_SQRT2 = 0.7071067811865475


@functools.lru_cache(maxsize=None)
def _vmem_limit_bytes():
    """Generation-aware scoped-VMEM limit.

    ~48 MiB on 64 MiB parts (v7x), ~100 MiB on 128 MiB parts (v5e / v6e).
    """
    try:
        cap = int(pltpu.get_tpu_info().vmem_capacity_bytes)
    except Exception:
        cap = 64 * 1024 * 1024          # conservative fallback (v7x-sized)
    if cap >= 128 * 1024 * 1024:
        return 100 * 1024 * 1024
    return 48 * 1024 * 1024


def _gelu(x):
    # exact (erf) GELU, matching torch.nn.GELU() default.
    # TODO(synk): tanh-approx GELU (EUP) is a possible micro-opt, but stage 1
    # is HBM-bound at real shapes and exact erf matches the PyTorch numerics.
    return 0.5 * x * (1.0 + lax.erf(x * _INV_SQRT2))


def _layer_norm(x, g, b, eps=1e-5):
    mean = jnp.mean(x, axis=-1, keepdims=True)
    var = jnp.mean((x - mean) ** 2, axis=-1, keepdims=True)
    return (x - mean) * lax.rsqrt(var + eps) * g + b


# ----------------------------------------------------------------------------
# Stage 1: ProjectionHead (batch-tiled, bf16 MXU matmuls, f32 LayerNorm)
# ----------------------------------------------------------------------------
def _proj_head_kernel(x_ref, w1_ref, b1_ref, w2_ref, b2_ref, g_ref, beta_ref,
                      out_ref):
    # x / w1 / w2 are bf16 (MXU operands); accumulation, bias add, GELU,
    # residual and LayerNorm stay in f32.  Biases/gains are [1, P] and
    # broadcast along sublanes for free.
    projected = jnp.dot(x_ref[...], w1_ref[...],
                        preferred_element_type=jnp.float32) + b1_ref[...]
    h = _gelu(projected)
    h = jnp.dot(h.astype(jnp.bfloat16), w2_ref[...],
                preferred_element_type=jnp.float32) + b2_ref[...]
    # TODO(synk): nn.Dropout(p=0.1) omitted (identity in eval mode).
    h = h + projected
    out_ref[...] = _layer_norm(h, g_ref[...], beta_ref[...]).astype(out_ref.dtype)


def _pick_block_b(B):
    """Largest multiple-of-8 divisor of B that is <= 512 and keeps grid >= 2.

    grid >= 2 lets dimension_semantics=("parallel",) shard the batch across
    both v7x TensorCores; on single-TC v5e/v6e the larger tile (toward 512
    rows) simply amortizes the per-step DMA / pipeline overhead better.
    """
    target = min(512, B // 2)
    best = 0
    cand = 8
    while cand <= target:
        if B % cand == 0:
            best = cand
        cand += 8
    return best if best else B          # tiny/odd batch: single full tile


def _const_spec(shape, single_buffer=True):
    """BlockSpec for a weight whose block index never changes.

    Single-buffered (pipeline_mode=pl.Buffered(1)) so the pipeline does not
    allocate a useless second VMEM copy of the resident weights.
    """
    index_map = lambda i: (0, 0)
    if single_buffer and hasattr(pl, "Buffered"):
        try:
            return pl.BlockSpec(shape, index_map, pipeline_mode=pl.Buffered(1))
        except TypeError:
            pass
    return pl.BlockSpec(shape, index_map)


def projection_head_pallas(x, w1, b1, w2, b2, g, beta, *, block_b=None):
    """x: [B, D] bf16; w1: [D, P] bf16; w2: [P, P] bf16; b/g/beta: [1, P] f32."""
    B, D = x.shape
    P = w1.shape[1]
    if block_b is None:
        block_b = _pick_block_b(B)
    block_b = min(block_b, B)
    assert B % block_b == 0, (B, block_b)
    assert block_b % 8 == 0 or block_b == B, (B, block_b)
    assert D % 128 == 0 and P % 128 == 0, "feature dims must be lane-dense (128)"

    def call(single_buffer_weights):
        def wspec(shape):
            return _const_spec(shape, single_buffer=single_buffer_weights)

        return pl.pallas_call(
            _proj_head_kernel,
            out_shape=jax.ShapeDtypeStruct((B, P), jnp.bfloat16),
            grid=(B // block_b,),
            in_specs=[
                pl.BlockSpec((block_b, D), lambda i: (i, 0)),  # activations
                wspec((D, P)),                                 # w1 (resident)
                wspec((1, P)),                                 # b1
                wspec((P, P)),                                 # w2
                wspec((1, P)),                                 # b2
                wspec((1, P)),                                 # gamma
                wspec((1, P)),                                 # beta
            ],
            out_specs=pl.BlockSpec((block_b, P), lambda i: (i, 0)),
            compiler_params=pltpu.CompilerParams(
                dimension_semantics=("parallel",),   # v7x: batch over 2 TCs
                vmem_limit_bytes=_vmem_limit_bytes()),
        )(x, w1, b1, w2, b2, g, beta)

    try:
        return call(True)
    except Exception:
        # TODO(synk): some Mosaic builds may reject Buffered(1) on inputs;
        # fall back to default double-buffered weight specs.
        return call(False)


# ----------------------------------------------------------------------------
# Stage 2: contrastive loss (fused Gram matmul, folded bidirectional CE)
# ----------------------------------------------------------------------------
def _clip_loss_kernel(neg_inv_2b, scalars_ref, img_emb_ref, txt_emb_ref,
                      loss_ref):
    inv_temp = scalars_ref[0]     # 1 / temperature   (SMEM scalar)
    half_temp = scalars_ref[1]    # temperature / 2   (SMEM scalar)

    def mm_nt(a, b):
        # a @ b.T on the MXU, contracting the last dim of BOTH operands.
        # TODO(synk): if the Mosaic dump shows an XLU transpose of the RHS,
        # stage 1 should additionally emit transposed [P, B] embeddings.
        return lax.dot_general(a, b, (((1,), (1,)), ((), ())),
                               preferred_element_type=jnp.float32)

    img = img_emb_ref[...]                                  # [B, P] bf16
    txt = txt_emb_ref[...]                                  # [B, P] bf16

    # Fused self-Gram: cat @ cat.T == img@img.T + txt@txt.T, one MXU pass
    # with K = 2P (better push/pop cadence, one fewer [B,B] buffer + add).
    cat = jnp.concatenate([img, txt], axis=-1)              # [B, 2P] bf16
    sim = mm_nt(cat, cat) * half_temp                       # [B, B] f32

    # targets = row-softmax(sim); exact reciprocal so row-sum(targets) == 1,
    # which the algebraic log-softmax folding below relies on.
    m_t = jnp.max(sim, axis=-1, keepdims=True)
    e_t = jnp.exp(sim - m_t)
    targets = e_t * pl.reciprocal(jnp.sum(e_t, axis=-1, keepdims=True),
                                  approx=False)

    logits = mm_nt(txt, img) * inv_temp                     # [B, B] f32

    # Row / column logsumexp of the logits (never materialize log-softmax):
    m_r = jnp.max(logits, axis=-1, keepdims=True)           # [B, 1]
    lse_r = m_r + jnp.log(jnp.sum(jnp.exp(logits - m_r), axis=-1,
                                  keepdims=True))
    m_c = jnp.max(logits, axis=0, keepdims=True)            # [1, B]
    lse_c = m_c + jnp.log(jnp.sum(jnp.exp(logits - m_c), axis=0,
                                  keepdims=True))
    col_t = jnp.sum(targets, axis=0, keepdims=True)         # [1, B]

    #   sum(targets * (row_lsm + col_lsm))
    # = 2*sum(targets*logits) - sum_i rowLSE_i - sum_j colsum(targets)_j*colLSE_j
    # and  mean_i((texts_loss_i + images_loss_i)/2) = -that / (2B).
    s = (2.0 * jnp.sum(targets * logits)
         - jnp.sum(lse_r)
         - jnp.sum(col_t * lse_c))
    loss_ref[0, 0] = s * neg_inv_2b


def clip_loss_pallas(img_emb, txt_emb, temperature=1.0):
    B = img_emb.shape[0]
    t = jnp.asarray(temperature, dtype=jnp.float32)
    scalars = jnp.stack([1.0 / t, 0.5 * t]).astype(jnp.float32)  # SMEM scalars
    kernel = functools.partial(_clip_loss_kernel, float(-1.0 / (2.0 * B)))

    vmem_full = pl.BlockSpec(memory_space=pltpu.MemorySpace.VMEM)
    smem_full = pl.BlockSpec(memory_space=pltpu.MemorySpace.SMEM)
    # Gridless call: whole arrays staged once in VMEM (memory-space-only
    # specs, no pipelining => no wasted double buffers).  Peak live [B,B] f32
    # is ~2 buffers, fine through B ~ 2K even on v7x's 64 MiB VMEM.
    # TODO(synk): for B >~ 2K, switch to a row-tiled two-pass kernel
    # (column-LSE accumulation pass + per-row-tile loss pass).
    loss = pl.pallas_call(
        kernel,
        out_shape=jax.ShapeDtypeStruct((1, 1), jnp.float32),
        in_specs=[smem_full, vmem_full, vmem_full],
        out_specs=pl.BlockSpec(memory_space=pltpu.MemorySpace.SMEM),
        compiler_params=pltpu.CompilerParams(
            vmem_limit_bytes=_vmem_limit_bytes()),
    )(scalars, img_emb, txt_emb)
    return loss[0, 0]


# ----------------------------------------------------------------------------
# Full CLIP forward (wrapper): padding + bf16 casts + the two Pallas stages
# ----------------------------------------------------------------------------
def _pad_cols(x, m=128):
    pad = (-x.shape[-1]) % m
    return x if pad == 0 else jnp.pad(x, ((0, 0), (0, pad)))


def _pad_rows(w, m=128):
    pad = (-w.shape[0]) % m
    return w if pad == 0 else jnp.pad(w, ((0, pad), (0, 0)))


def clip_forward_pallas(img_feat, txt_feat, params, temperature=1.0,
                        block_b=None):
    """img_feat: [B, Di] f32, txt_feat: [B, Dt] f32, params: dict of f32."""
    bf16 = jnp.bfloat16
    # Lane-dense padding of the text feature dim (e.g. 64 -> 128): zero-pad the
    # activations and the matching K rows of txt_w1 (exact zero contributions).
    txt_feat_p = _pad_cols(txt_feat, 128)
    txt_w1_p = _pad_rows(params["txt_w1"], 128)

    img_emb = projection_head_pallas(
        img_feat.astype(bf16),
        params["img_w1"].astype(bf16), params["img_b1"],
        params["img_w2"].astype(bf16), params["img_b2"],
        params["img_g"], params["img_beta"], block_b=block_b)
    txt_emb = projection_head_pallas(
        txt_feat_p.astype(bf16),
        txt_w1_p.astype(bf16), params["txt_b1"],
        params["txt_w2"].astype(bf16), params["txt_b2"],
        params["txt_g"], params["txt_beta"], block_b=block_b)
    return clip_loss_pallas(img_emb, txt_emb, temperature)


# ----------------------------------------------------------------------------
# Encoder stubs (glue, plain JAX)
# ----------------------------------------------------------------------------
def image_encoder_stub(x, w_enc):
    # TODO(synk): timm ResNet50 backbone replaced by global-avg-pool + linear stub.
    pooled = jnp.mean(x, axis=(2, 3))        # NCHW -> [B, C]
    return pooled @ w_enc                    # [B, image_embedding]


def text_encoder_stub(input_ids, attention_mask, emb_table):
    # TODO(synk): DistilBERT replaced by an embedding-lookup stub; returns the
    # CLS (token index 0) hidden state; attention_mask unused by the stub.
    del attention_mask
    return emb_table[input_ids[:, 0]]        # [B, text_embedding]


# ----------------------------------------------------------------------------
# Pure-JAX reference (original transposed formulation) for validation.
# matmul_dtype lets us build a precision-matched (bf16-operand) reference.
# ----------------------------------------------------------------------------
def _clip_loss_ref(img_feat, txt_feat, p, temperature=1.0,
                   matmul_dtype=jnp.float32):
    def mm(a, b):
        return jnp.dot(a.astype(matmul_dtype), b.astype(matmul_dtype),
                       preferred_element_type=jnp.float32)

    def head(x, w1, b1, w2, b2, g, beta):
        pr = mm(x, w1) + b1
        h = _gelu(pr)
        h = mm(h, w2) + b2
        h = h + pr
        return _layer_norm(h, g, beta).astype(matmul_dtype)

    ie = head(img_feat, p["img_w1"], p["img_b1"], p["img_w2"], p["img_b2"],
              p["img_g"], p["img_beta"])
    te = head(txt_feat, p["txt_w1"], p["txt_b1"], p["txt_w2"], p["txt_b2"],
              p["txt_g"], p["txt_beta"])
    logits = mm(te, ie.T) / temperature
    tgt = jax.nn.softmax((mm(ie, ie.T) + mm(te, te.T)) / 2.0 * temperature,
                         axis=-1)
    tl = jnp.sum(-tgt * jax.nn.log_softmax(logits, axis=-1), axis=1)
    il = jnp.sum(-tgt.T * jax.nn.log_softmax(logits.T, axis=-1), axis=1)
    return jnp.mean((il + tl) / 2.0)


# ----------------------------------------------------------------------------
if __name__ == "__main__":
    # small shapes consistent with the forward pass
    B, C, H, W = 32, 4, 16, 16         # image batch (NCHW)
    S, VOCAB = 8, 64                   # text seq / vocab
    IMG_EMB, TXT_EMB, PROJ = 128, 64, 128   # stand-ins for 2048 / 768 / 256
    TEMPERATURE = 1.0

    key = jax.random.PRNGKey(0)
    ks = jax.random.split(key, 12)

    image = jax.random.normal(ks[0], (B, C, H, W), jnp.float32)
    input_ids = jax.random.randint(ks[1], (B, S), 0, VOCAB, jnp.int32)
    attention_mask = jnp.ones((B, S), jnp.int32)

    # encoder stub parameters (deterministic)
    w_img_enc = 0.05 * jax.random.normal(ks[2], (C, IMG_EMB), jnp.float32)
    txt_emb_table = 0.05 * jax.random.normal(ks[3], (VOCAB, TXT_EMB), jnp.float32)

    # projection-head parameters (weights stored [in, out]; biases/scales [1, out])
    params = {
        "img_w1": 0.02 * jax.random.normal(ks[4], (IMG_EMB, PROJ), jnp.float32),
        "img_b1": 0.01 * jax.random.normal(ks[5], (1, PROJ), jnp.float32),
        "img_w2": 0.02 * jax.random.normal(ks[6], (PROJ, PROJ), jnp.float32),
        "img_b2": 0.01 * jax.random.normal(ks[7], (1, PROJ), jnp.float32),
        "img_g": jnp.ones((1, PROJ), jnp.float32),
        "img_beta": jnp.zeros((1, PROJ), jnp.float32),
        "txt_w1": 0.02 * jax.random.normal(ks[8], (TXT_EMB, PROJ), jnp.float32),
        "txt_b1": 0.01 * jax.random.normal(ks[9], (1, PROJ), jnp.float32),
        "txt_w2": 0.02 * jax.random.normal(ks[10], (PROJ, PROJ), jnp.float32),
        "txt_b2": 0.01 * jax.random.normal(ks[11], (1, PROJ), jnp.float32),
        "txt_g": jnp.ones((1, PROJ), jnp.float32),
        "txt_beta": jnp.zeros((1, PROJ), jnp.float32),
    }

    # encoders (stubs, glue)
    img_feat = image_encoder_stub(image, w_img_enc)                        # [B, IMG_EMB]
    txt_feat = text_encoder_stub(input_ids, attention_mask, txt_emb_table) # [B, TXT_EMB]

    # Pallas: projection heads (batch-tiled, grid >= 2) + contrastive loss.
    # block_b=None -> auto: largest multiple-of-8 divisor of B that keeps the
    # grid >= 2 (16 here), so the "parallel" axis can shard across v7x TCs.
    loss = clip_forward_pallas(img_feat, txt_feat, params, TEMPERATURE,
                               block_b=None)
    loss = jax.block_until_ready(loss)

    # 1) precision-matched reference (bf16 matmul operands, f32 accumulation)
    ref_bf16 = jax.block_until_ready(
        _clip_loss_ref(img_feat, txt_feat, params, TEMPERATURE,
                       matmul_dtype=jnp.bfloat16))
    # 2) full-f32 reference (original module numerics); looser tolerance
    #    accounts for the intentional bf16 MXU policy in the kernel.
    ref_f32 = jax.block_until_ready(
        _clip_loss_ref(img_feat, txt_feat, params, TEMPERATURE,
                       matmul_dtype=jnp.float32))

    assert jnp.isfinite(loss), "loss is not finite"
    assert jnp.allclose(loss, ref_bf16, rtol=5e-3, atol=5e-3), (loss, ref_bf16)
    assert jnp.allclose(loss, ref_f32, rtol=5e-2, atol=5e-2), (loss, ref_f32)

    print("KERNEL_OK")
</pallas_src>

<mosaic_0001>
module attributes {stable_mosaic.version = 11 : i64} {
  func.func @_proj_head_kernel(%arg0: i32, %arg1: memref<16x128xbf16, #tpu.memory_space<vmem>>, %arg2: memref<128x128xbf16, #tpu.memory_space<vmem>>, %arg3: memref<1x128xf32, #tpu.memory_space<vmem>>, %arg4: memref<128x128xbf16, #tpu.memory_space<vmem>>, %arg5: memref<1x128xf32, #tpu.memory_space<vmem>>, %arg6: memref<1x128xf32, #tpu.memory_space<vmem>>, %arg7: memref<1x128xf32, #tpu.memory_space<vmem>>, %arg8: memref<16x128xbf16, #tpu.memory_space<vmem>>) attributes {dimension_semantics = [#tpu.dimension_semantics<parallel>], iteration_bounds = array<i64: 2>, scalar_prefetch = 0 : i64, scratch_operands = 0 : i64, tpu.core_type = #tpu.core_type<tc>, window_params = [{transform_indices = @transform_0, window_bounds = array<i64: 16, 128>}, {pipeline_mode = #tpu.pipeline_mode<synchronous>, transform_indices = @transform_1, window_bounds = array<i64: 128, 128>}, {pipeline_mode = #tpu.pipeline_mode<synchronous>, transform_indices = @transform_2, window_bounds = array<i64: 1, 128>}, {pipeline_mode = #tpu.pipeline_mode<synchronous>, transform_indices = @transform_3, window_bounds = array<i64: 128, 128>}, {pipeline_mode = #tpu.pipeline_mode<synchronous>, transform_indices = @transform_4, window_bounds = array<i64: 1, 128>}, {pipeline_mode = #tpu.pipeline_mode<synchronous>, transform_indices = @transform_5, window_bounds = array<i64: 1, 128>}, {pipeline_mode = #tpu.pipeline_mode<synchronous>, transform_indices = @transform_6, window_bounds = array<i64: 1, 128>}, {transform_indices = @transform_7, window_bounds = array<i64: 16, 128>}]} {
    %c0 = arith.constant 0 : index
    %c0_0 = arith.constant 0 : index
    %0 = vector.load %arg1[%c0, %c0_0] : memref<16x128xbf16, #tpu.memory_space<vmem>>, vector<16x128xbf16>
    %c0_1 = arith.constant 0 : index
    %c0_2 = arith.constant 0 : index
    %1 = vector.load %arg2[%c0_1, %c0_2] : memref<128x128xbf16, #tpu.memory_space<vmem>>, vector<128x128xbf16>
    %cst = arith.constant dense<0.000000e+00> : vector<16x128xf32>
    %2 = tpu.matmul %0, %1, %cst {dimension_numbers = #tpu.dot_dimension_numbers<[1], [0], [0], [1], [0, 0, 1, 1], [], []>} : vector<16x128xbf16>, vector<128x128xbf16>, vector<16x128xf32> -> vector<16x128xf32>
    %c0_3 = arith.constant 0 : index
    %c0_4 = arith.constant 0 : index
    %3 = vector.load %arg3[%c0_3, %c0_4] : memref<1x128xf32, #tpu.memory_space<vmem>>, vector<1x128xf32>
    %4 = vector.broadcast %3 : vector<1x128xf32> to vector<16x128xf32>
    %5 = arith.addf %2, %4 : vector<16x128xf32>
    %cst_5 = arith.constant 5.000000e-01 : f32
    %6 = vector.broadcast %cst_5 : f32 to vector<16x128xf32>
    %7 = arith.mulf %6, %5 : vector<16x128xf32>
    %cst_6 = arith.constant 0.707106769 : f32
    %8 = vector.broadcast %cst_6 : f32 to vector<16x128xf32>
    %9 = arith.mulf %5, %8 : vector<16x128xf32>
    %10 = math.erf %9 : vector<16x128xf32>
    %cst_7 = arith.constant 1.000000e+00 : f32
    %11 = vector.broadcast %cst_7 : f32 to vector<16x128xf32>
    %12 = arith.addf %11, %10 : vector<16x128xf32>
    %13 = arith.mulf %7, %12 : vector<16x128xf32>
    %14 = arith.truncf %13 : vector<16x128xf32> to vector<16x128xbf16>
    %c0_8 = arith.constant 0 : index
    %c0_9 = arith.constant 0 : index
    %15 = vector.load %arg4[%c0_8, %c0_9] : memref<128x128xbf16, #tpu.memory_space<vmem>>, vector<128x128xbf16>
    %cst_10 = arith.constant dense<0.000000e+00> : vector<16x128xf32>
    %16 = tpu.matmul %14, %15, %cst_10 {dimension_numbers = #tpu.dot_dimension_numbers<[1], [0], [0], [1], [0, 0, 1, 1], [], []>} : vector<16x128xbf16>, vector<128x128xbf16>, vector<16x128xf32> -> vector<16x128xf32>
    %c0_11 = arith.constant 0 : index
    %c0_12 = arith.constant 0 : index
    %17 = vector.load %arg5[%c0_11, %c0_12] : memref<1x128xf32, #tpu.memory_space<vmem>>, vector<1x128xf32>
    %18 = vector.broadcast %17 : vector<1x128xf32> to vector<16x128xf32>
    %19 = arith.addf %16, %18 : vector<16x128xf32>
    %20 = arith.addf %19, %5 : vector<16x128xf32>
    %c0_13 = arith.constant 0 : index
    %c0_14 = arith.constant 0 : index
    %21 = vector.load %arg6[%c0_13, %c0_14] : memref<1x128xf32, #tpu.memory_space<vmem>>, vector<1x128xf32>
    %c0_15 = arith.constant 0 : index
    %c0_16 = arith.constant 0 : index
    %22 = vector.load %arg7[%c0_15, %c0_16] : memref<1x128xf32, #tpu.memory_space<vmem>>, vector<1x128xf32>
    %cst_17 = arith.constant dense<0.000000e+00> : vector<16xf32>
    %23 = vector.multi_reduction <add>, %20, %cst_17 [1] : vector<16x128xf32> to vector<16xf32>
    %24 = vector.shape_cast %23 : vector<16xf32> to vector<16x1xf32>
    %cst_18 = arith.constant 1.280000e+02 : f32
    %25 = vector.broadcast %cst_18 : f32 to vector<16x1xf32>
    %26 = arith.divf %24, %25 : vector<16x1xf32>
    %27 = vector.broadcast %26 : vector<16x1xf32> to vector<16x128xf32>
    %28 = arith.subf %20, %27 : vector<16x128xf32>
    %29 = arith.mulf %28, %28 : vector<16x128xf32>
    %cst_19 = arith.constant dense<0.000000e+00> : vector<16xf32>
    %30 = vector.multi_reduction <add>, %29, %cst_19 [1] : vector<16x128xf32> to vector<16xf32>
    %31 = vector.shape_cast %30 : vector<16xf32> to vector<16x1xf32>
    %cst_20 = arith.constant 1.280000e+02 : f32
    %32 = vector.broadcast %cst_20 : f32 to vector<16x1xf32>
    %33 = arith.divf %31, %32 : vector<16x1xf32>
    %34 = vector.broadcast %26 : vector<16x1xf32> to vector<16x128xf32>
    %35 = arith.subf %20, %34 : vector<16x128xf32>
    %cst_21 = arith.constant 9.99999974E-6 : f32
    %36 = vector.broadcast %cst_21 : f32 to vector<16x1xf32>
    %37 = arith.addf %33, %36 : vector<16x1xf32>
    %38 = math.rsqrt %37 : vector<16x1xf32>
    %39 = vector.broadcast %38 : vector<16x1xf32> to vector<16x128xf32>
    %40 = arith.mulf %35, %39 : vector<16x128xf32>
    %41 = vector.broadcast %21 : vector<1x128xf32> to vector<16x128xf32>
    %42 = arith.mulf %40, %41 : vector<16x128xf32>
    %43 = vector.broadcast %22 : vector<1x128xf32> to vector<16x128xf32>
    %44 = arith.addf %42, %43 : vector<16x128xf32>
    %45 = arith.truncf %44 : vector<16x128xf32> to vector<16x128xbf16>
    %c0_22 = arith.constant 0 : index
    %c0_23 = arith.constant 0 : index
    %46 = vector.load %arg8[%c0_22, %c0_23] : memref<16x128xbf16, #tpu.memory_space<vmem>>, vector<16x128xbf16>
    tpu.vector_store %arg8[%c0_22, %c0_23], %45 {strides = array<i32>} : memref<16x128xbf16, #tpu.memory_space<vmem>>, vector<16x128xbf16>,
    return
  }
  func.func @transform_0(%arg0: i32) -> (i32, i32) {
    %c0_i32 = arith.constant 0 : i32
    %c0_i32_0 = arith.constant 0 : i32
    return %arg0, %c0_i32 : i32, i32
  }
  func.func @transform_1(%arg0: i32) -> (i32, i32) {
    %c0_i32 = arith.constant 0 : i32
    %c0_i32_0 = arith.constant 0 : i32
    %c0_i32_1 = arith.constant 0 : i32
    return %c0_i32, %c0_i32_0 : i32, i32
  }
  func.func @transform_2(%arg0: i32) -> (i32, i32) {
    %c0_i32 = arith.constant 0 : i32
    %c0_i32_0 = arith.constant 0 : i32
    %c0_i32_1 = arith.constant 0 : i32
    return %c0_i32, %c0_i32_0 : i32, i32
  }
  func.func @transform_3(%arg0: i32) -> (i32, i32) {
    %c0_i32 = arith.constant 0 : i32
    %c0_i32_0 = arith.constant 0 : i32
    %c0_i32_1 = arith.constant 0 : i32
    return %c0_i32, %c0_i32_0 : i32, i32
  }
  func.func @transform_4(%arg0: i32) -> (i32, i32) {
    %c0_i32 = arith.constant 0 : i32
    %c0_i32_0 = arith.constant 0 : i32
    %c0_i32_1 = arith.constant 0 : i32
    return %c0_i32, %c0_i32_0 : i32, i32
  }
  func.func @transform_5(%arg0: i32) -> (i32, i32) {
    %c0_i32 = arith.constant 0 : i32
    %c0_i32_0 = arith.constant 0 : i32
    %c0_i32_1 = arith.constant 0 : i32
    return %c0_i32, %c0_i32_0 : i32, i32
  }
  func.func @transform_6(%arg0: i32) -> (i32, i32) {
    %c0_i32 = arith.constant 0 : i32
    %c0_i32_0 = arith.constant 0 : i32
    %c0_i32_1 = arith.constant 0 : i32
    return %c0_i32, %c0_i32_0 : i32, i32
  }
  func.func @transform_7(%arg0: i32) -> (i32, i32) {
    %c0_i32 = arith.constant 0 : i32
    %c0_i32_0 = arith.constant 0 : i32
    return %arg0, %c0_i32 : i32, i32
  }
}

module attributes {stable_mosaic.version = 11 : i64} {
  func.func @_proj_head_kernel(%arg0: i32, %arg1: memref<16x128xbf16, #tpu.memory_space<vmem>>, %arg2: memref<128x128xbf16, #tpu.memory_space<vmem>>, %arg3: memref<1x128xf32, #tpu.memory_space<vmem>>, %arg4: memref<128x128xbf16, #tpu.memory_space<vmem>>, %arg5: memref<1x128xf32, #tpu.memory_space<vmem>>, %arg6: memref<1x128xf32, #tpu.memory_space<vmem>>, %arg7: memref<1x128xf32, #tpu.memory_space<vmem>>, %arg8: memref<16x128xbf16, #tpu.memory_space<vmem>>) attributes {dimension_semantics = [#tpu.dimension_semantics<parallel>], iteration_bounds = array<i64: 2>, scalar_prefetch = 0 : i64, scratch_operands = 0 : i64, tpu.core_type = #tpu.core_type<tc>, window_params = [{transform_indices = @transform_0, window_bounds = array<i64: 16, 128>}, {pipeline_mode = #tpu.pipeline_mode<synchronous>, transform_indices = @transform_1, window_bounds = array<i64: 128, 128>}, {pipeline_mode = #tpu.pipeline_mode<synchronous>, transform_indices = @transform_2, window_bounds = array<i64: 1, 128>}, {pipeline_mode = #tpu.pipeline_mode<synchronous>, transform_indices = @transform_3, window_bounds = array<i64: 128, 128>}, {pipeline_mode = #tpu.pipeline_mode<synchronous>, transform_indices = @transform_4, window_bounds = array<i64: 1, 128>}, {pipeline_mode = #tpu.pipeline_mode<synchronous>, transform_indices = @transform_5, window_bounds = array<i64: 1, 128>}, {pipeline_mode = #tpu.pipeline_mode<synchronous>, transform_indices = @transform_6, window_bounds = array<i64: 1, 128>}, {transform_indices = @transform_7, window_bounds = array<i64: 16, 128>}]} {
    %c0 = arith.constant 0 : index
    %c0_0 = arith.constant 0 : index
    %0 = vector.load %arg1[%c0, %c0_0] : memref<16x128xbf16, #tpu.memory_space<vmem>>, vector<16x128xbf16>
    %c0_1 = arith.constant 0 : index
    %c0_2 = arith.constant 0 : index
    %1 = vector.load %arg2[%c0_1, %c0_2] : memref<128x128xbf16, #tpu.memory_space<vmem>>, vector<128x128xbf16>
    %cst = arith.constant dense<0.000000e+00> : vector<16x128xf32>
    %2 = tpu.matmul %0, %1, %cst {dimension_numbers = #tpu.dot_dimension_numbers<[1], [0], [0], [1], [0, 0, 1, 1], [], []>} : vector<16x128xbf16>, vector<128x128xbf16>, vector<16x128xf32> -> vector<16x128xf32>
    %c0_3 = arith.constant 0 : index
    %c0_4 = arith.constant 0 : index
    %3 = vector.load %arg3[%c0_3, %c0_4] : memref<1x128xf32, #tpu.memory_space<vmem>>, vector<1x128xf32>
    %4 = vector.broadcast %3 : vector<1x128xf32> to vector<16x128xf32>
    %5 = arith.addf %2, %4 : vector<16x128xf32>
    %cst_5 = arith.constant 5.000000e-01 : f32
    %6 = vector.broadcast %cst_5 : f32 to vector<16x128xf32>
    %7 = arith.mulf %6, %5 : vector<16x128xf32>
    %cst_6 = arith.constant 0.707106769 : f32
    %8 = vector.broadcast %cst_6 : f32 to vector<16x128xf32>
    %9 = arith.mulf %5, %8 : vector<16x128xf32>
    %10 = math.erf %9 : vector<16x128xf32>
    %cst_7 = arith.constant 1.000000e+00 : f32
    %11 = vector.broadcast %cst_7 : f32 to vector<16x128xf32>
    %12 = arith.addf %11, %10 : vector<16x128xf32>
    %13 = arith.mulf %7, %12 : vector<16x128xf32>
    %14 = arith.truncf %13 : vector<16x128xf32> to vector<16x128xbf16>
    %c0_8 = arith.constant 0 : index
    %c0_9 = arith.constant 0 : index
    %15 = vector.load %arg4[%c0_8, %c0_9] : memref<128x128xbf16, #tpu.memory_space<vmem>>, vector<128x128xbf16>
    %cst_10 = arith.constant dense<0.000000e+00> : vector<16x128xf32>
    %16 = tpu.matmul %14, %15, %cst_10 {dimension_numbers = #tpu.dot_dimension_numbers<[1], [0], [0], [1], [0, 0, 1, 1], [], []>} : vector<16x128xbf16>, vector<128x128xbf16>, vector<16x128xf32> -> vector<16x128xf32>
    %c0_11 = arith.constant 0 : index
    %c0_12 = arith.constant 0 : index
    %17 = vector.load %arg5[%c0_11, %c0_12] : memref<1x128xf32, #tpu.memory_space<vmem>>, vector<1x128xf32>
    %18 = vector.broadcast %17 : vector<1x128xf32> to vector<16x128xf32>
    %19 = arith.addf %16, %18 : vector<16x128xf32>
    %20 = arith.addf %19, %5 : vector<16x128xf32>
    %c0_13 = arith.constant 0 : index
    %c0_14 = arith.constant 0 : index
    %21 = vector.load %arg6[%c0_13, %c0_14] : memref<1x128xf32, #tpu.memory_space<vmem>>, vector<1x128xf32>
    %c0_15 = arith.constant 0 : index
    %c0_16 = arith.constant 0 : index
    %22 = vector.load %arg7[%c0_15, %c0_16] : memref<1x128xf32, #tpu.memory_space<vmem>>, vector<1x128xf32>
    %cst_17 = arith.constant dense<0.000000e+00> : vector<16xf32>
    %23 = vector.multi_reduction <add>, %20, %cst_17 [1] : vector<16x128xf32> to vector<16xf32>
    %24 = vector.shape_cast %23 : vector<16xf32> to vector<16x1xf32>
    %cst_18 = arith.constant 1.280000e+02 : f32
    %25 = vector.broadcast %cst_18 : f32 to vector<16x1xf32>
    %26 = arith.divf %24, %25 : vector<16x1xf32>
    %27 = vector.broadcast %26 : vector<16x1xf32> to vector<16x128xf32>
    %28 = arith.subf %20, %27 : vector<16x128xf32>
    %29 = arith.mulf %28, %28 : vector<16x128xf32>
    %cst_19 = arith.constant dense<0.000000e+00> : vector<16xf32>
    %30 = vector.multi_reduction <add>, %29, %cst_19 [1] : vector<16x128xf32> to vector<16xf32>
    %31 = vector.shape_cast %30 : vector<16xf32> to vector<16x1xf32>
    %cst_20 = arith.constant 1.280000e+02 : f32
    %32 = vector.broadcast %cst_20 : f32 to vector<16x1xf32>
    %33 = arith.divf %31, %32 : vector<16x1xf32>
    %34 = vector.broadcast %26 : vector<16x1xf32> to vector<16x128xf32>
    %35 = arith.subf %20, %34 : vector<16x128xf32>
    %cst_21 = arith.constant 9.99999974E-6 : f32
    %36 = vector.broadcast %cst_21 : f32 to vector<16x1xf32>
    %37 = arith.addf %33, %36 : vector<16x1xf32>
    %38 = math.rsqrt %37 : vector<16x1xf32>
    %39 = vector.broadcast %38 : vector<16x1xf32> to vector<16x128xf32>
    %40 = arith.mulf %35, %39 : vector<16x128xf32>
    %41 = vector.broadcast %21 : vector<1x128xf32> to vector<16x128xf32>
    %42 = arith.mulf %40, %41 : vector<16x128xf32>
    %43 = vector.broadcast %22 : vector<1x128xf32> to vector<16x128xf32>
    %44 = arith.addf %42, %43 : vector<16x128xf32>
    %45 = arith.truncf %44 : vector<16x128xf32> to vector<16x128xbf16>
    %c0_22 = arith.constant 0 : index
    %c0_23 = arith.constant 0 : index
    %46 = vector.load %arg8[%c0_22, %c0_23] : memref<16x128xbf16, #tpu.memory_space<vmem>>, vector<16x128xbf16>
    tpu.vector_store %arg8[%c0_22, %c0_23], %45 {strides = array<i32>} : memref<16x128xbf16, #tpu.memory_space<vmem>>, vector<16x128xbf16>,
    return
  }
  func.func @transform_0(%arg0: i32) -> (i32, i32) {
    %c0_i32 = arith.constant 0 : i32
    %c0_i32_0 = arith.constant 0 : i32
    return %arg0, %c0_i32 : i32, i32
  }
  func.func @transform_1(%arg0: i32) -> (i32, i32) {
    %c0_i32 = arith.constant 0 : i32
    %c0_i32_0 = arith.constant 0 : i32
    %c0_i32_1 = arith.constant 0 : i32
    return %c0_i32, %c0_i32_0 : i32, i32
  }
  func.func @transform_2(%arg0: i32) -> (i32, i32) {
    %c0_i32 = arith.constant 0 : i32
    %c0_i32_0 = arith.constant 0 : i32
    %c0_i32_1 = arith.constant 0 : i32
    return %c0_i32, %c0_i32_0 : i32, i32
  }
  func.func @transform_3(%arg0: i32) -> (i32, i32) {
    %c0_i32 = arith.constant 0 : i32
    %c0_i32_0 = arith.constant 0 : i32
    %c0_i32_1 = arith.constant 0 : i32
    return %c0_i32, %c0_i32_0 : i32, i32
  }
  func.func @transform_4(%arg0: i32) -> (i32, i32) {
    %c0_i32 = arith.constant 0 : i32
    %c0_i32_0 = arith.constant 0 : i32
    %c0_i32_1 = arith.constant 0 : i32
    return %c0_i32, %c0_i32_0 : i32, i32
  }
  func.func @transform_5(%arg0: i32) -> (i32, i32) {
    %c0_i32 = arith.constant 0 : i32
    %c0_i32_0 = arith.constant 0 : i32
    %c0_i32_1 = arith.constant 0 : i32
    return %c0_i32, %c0_i32_0 : i32, i32
  }
  func.func @transform_6(%arg0: i32) -> (i32, i32) {
    %c0_i32 = arith.constant 0 : i32
    %c0_i32_0 = arith.constant 0 : i32
    %c0_i32_1 = arith.constant 0 : i32
    return %c0_i32, %c0_i32_0 : i32, i32
  }
  func.func @transform_7(%arg0: i32) -> (i32, i32) {
    %c0_i32 = arith.constant 0 : i32
    %c0_i32_0 = arith.constant 0 : i32
    return %arg0, %c0_i32 : i32, i32
  }
}

</mosaic_0001>

<llo_original>
// kernel: tpu_custom_call.1
$region0: #{tpu_custom_call.1}
  #allocation0 [shape = 'u32[]', space=smem, size = 0x4, offset = 0x4, fixed_abs, tag = 'smem constant byte address 0x4 - core index']
  #allocation1 [shape = 'u32[144,128]{1,0:T(1,128)}', space=vmem, size = 0x12000, scoped, tag = 'internal scratch']
  %s0 = inlined_call_operand.hbm [shape: bf16[32,128], index: 0, kind: input, shape index: {}]
  %s1 = inlined_call_operand.hbm [shape: bf16[128,128], index: 1, kind: input, shape index: {}]
  %s2 = inlined_call_operand.vmem [shape: f32[1,128], index: 2, kind: input, shape index: {}]
  %s3 = inlined_call_operand.hbm [shape: bf16[128,128], index: 3, kind: input, shape index: {}]
  %s4 = inlined_call_operand.vmem [shape: f32[1,128], index: 4, kind: input, shape index: {}]
  %s5 = inlined_call_operand.vmem [shape: f32[1,128], index: 5, kind: input, shape index: {}]
  %s6 = inlined_call_operand.vmem [shape: f32[1,128], index: 6, kind: input, shape index: {}]
  %s7 = inlined_call_operand.hbm [shape: bf16[32,128], index: 7, kind: output, shape index: {}]
  %s8 = sld [smem:[#allocation0]]
  $region73: #{tpu_custom_call.1} parent=0
    _
  %s10 = ssub.s32 1, %s8
  %s11 = scalar_select 0, %s10, %s8
  $region1: #{tpu_custom_call.1} parent=0
    #allocation2 [shape = 'u8[8192]{0}', space=vmem, size = 0x2000, scoped, tag = 'input window, operand 0']
    #allocation3 [shape = 's32[2]{0}', space=sflag, size = 0x8, scoped, tag = 'scoped memory for tpu_custom_call.1']
    #allocation4 [shape = 's32[2]{0}', space=sflag, size = 0x8, scoped, tag = 'scoped memory for tpu_custom_call.1']
    #allocation5 [shape = 'u8[32768]{0}', space=vmem, size = 0x8000, scoped, tag = 'input window, operand 1, single buffered']
    #allocation6 [shape = 's32[1]{0}', space=sflag, size = 0x4, scoped, tag = 'scoped memory for tpu_custom_call.1']
    #allocation7 [shape = 'u8[32768]{0}', space=vmem, size = 0x8000, scoped, tag = 'input window, operand 3, single buffered']
    #allocation8 [shape = 'u8[8192]{0}', space=vmem, size = 0x2000, scoped, tag = 'output window, operand 0']
    %12 = vsyncpa [#allocation3], 0
    %s13 = scalar_lea.sflag [#allocation3], 1
    %14 = vsyncpa %s13, 0
    %15 = vsyncpa [#allocation6], 0
    %16 = vsyncpa [#allocation4], 0
    %s17 = scalar_lea.sflag [#allocation4], 1
    %18 = vsyncpa %s17, 0
    loop: start=0, step=1, limit=4
    $region2: #{tpu_custom_call.1} parent=1 // loop_pre_header
      _
    $region3: #{tpu_custom_call.1} parent=1 // loop_header
      %s20 = sphi 0, %s24
      %p21 = scmp.ge.s32.totalorder %s20, 4
      %s30 = sphi 0, %s32
      %s33 = sphi 0, %s30
      %s34 = sphi 0, %s33
      %s50 = sphi 0, %s34
      %s54 = sphi 0, %s54
      %s56 = sphi 0, %s54
      %s57 = sphi 0, %s56
      %s71 = sphi 0, %s57
      %s75 = sphi 0, %s75
      %s77 = sphi 0, %s75
      %s78 = sphi 0, %s77
      %s92 = sphi 0, %s78
      %s96 = sphi 0, %s96
      %s98 = sphi 0, %s96
      %s99 = sphi 0, %s98
      %s113 = sphi 0, %s99
      %s117 = sphi 0, %s117
      %s119 = sphi 0, %s117
      %s120 = sphi 0, %s119
      %s134 = sphi 0, %s120
      %s138 = sphi 0, %s138
      %s140 = sphi 0, %s138
      %s141 = sphi 0, %s140
      %s155 = sphi 0, %s141
      %s159 = sphi 0, %s159
      %s161 = sphi 0, %s159
      %s162 = sphi 0, %s161
      %s176 = sphi 0, %s162
      %s182 = sphi 0, %s184
      %s185 = sphi 0, %s182
      %s186 = sphi 0, %s185
      %s202 = sphi 0, %s186
    $region4: #{tpu_custom_call.1} parent=1 // loop_header_branch
      %23 = sbr.rel (%p21) target = $region8
    $region5: #{tpu_custom_call.1} parent=1 // loop_body
      %s25 = ssub.s32 %s20, 1
      %s26 = ssub.s32 %s20, 2
      %s27 = sadd.s32 %s20, 1
      %s28 = ssub.s32 %s20, %s27
      %p29 = scmp.eq.s32.totalorder %s28, 0
      %s31 = sadd.s32 %s30, 1
      %s32 = scalar_select %p29, %s30, %s31
      %p35 = pneg %p29
      %p36 = scmp.eq.s32.totalorder %s20, 1
      %p37 = por %p35, %p36
      %p38 = scmp.ne.s32.totalorder %s30, %s33
      %p39 = scmp.eq.s32.totalorder %s20, 0
      %p40 = por %p38, %p39
      %p41 = scmp.ne.s32.totalorder %s30, %s33
      %p42 = scmp.eq.s32.totalorder %s25, 1
      %p43 = por %p41, %p42
      %p44 = scmp.ne.s32.totalorder %s33, %s34
      %p45 = scmp.eq.s32.totalorder %s25, 0
      %p46 = por %p44, %p45
      %p47 = scmp.ne.s32.totalorder %s33, %s34
      %p48 = scmp.eq.s32.totalorder %s26, 1
      %p49 = por %p47, %p48
      %p51 = scmp.ne.s32.totalorder %s34, %s50
      %p52 = scmp.eq.s32.totalorder %s26, 0
      %p53 = por %p51, %p52
      %s55 = sadd.s32 %s54, 1
      %p58 = scmp.eq.s32.totalorder %s20, 1
      %p59 = scmp.ne.s32.totalorder %s54, %s56
      %p60 = scmp.eq.s32.totalorder %s20, 0
      %p61 = por %p59, %p60
      %p62 = scmp.ne.s32.totalorder %s54, %s56
      %p63 = scmp.eq.s32.totalorder %s25, 1
      %p64 = por %p62, %p63
      %p65 = scmp.ne.s32.totalorder %s56, %s57
      %p66 = scmp.eq.s32.totalorder %s25, 0
      %p67 = por %p65, %p66
      %p68 = scmp.ne.s32.totalorder %s56, %s57
      %p69 = scmp.eq.s32.totalorder %s26, 1
      %p70 = por %p68, %p69
      %p72 = scmp.ne.s32.totalorder %s57, %s71
      %p73 = scmp.eq.s32.totalorder %s26, 0
      %p74 = por %p72, %p73
      %s76 = sadd.s32 %s75, 1
      %p79 = scmp.eq.s32.totalorder %s20, 1
      %p80 = scmp.ne.s32.totalorder %s75, %s77
      %p81 = scmp.eq.s32.totalorder %s20, 0
      %p82 = por %p80, %p81
      %p83 = scmp.ne.s32.totalorder %s75, %s77
      %p84 = scmp.eq.s32.totalorder %s25, 1
      %p85 = por %p83, %p84
      %p86 = scmp.ne.s32.totalorder %s77, %s78
      %p87 = scmp.eq.s32.totalorder %s25, 0
      %p88 = por %p86, %p87
      %p89 = scmp.ne.s32.totalorder %s77, %s78
      %p90 = scmp.eq.s32.totalorder %s26, 1
      %p91 = por %p89, %p90
      %p93 = scmp.ne.s32.totalorder %s78, %s92
      %p94 = scmp.eq.s32.totalorder %s26, 0
      %p95 = por %p93, %p94
      %s97 = sadd.s32 %s96, 1
      %p100 = scmp.eq.s32.totalorder %s20, 1
      %p101 = scmp.ne.s32.totalorder %s96, %s98
      %p102 = scmp.eq.s32.totalorder %s20, 0
      %p103 = por %p101, %p102
      %p104 = scmp.ne.s32.totalorder %s96, %s98
      %p105 = scmp.eq.s32.totalorder %s25, 1
      %p106 = por %p104, %p105
      %p107 = scmp.ne.s32.totalorder %s98, %s99
      %p108 = scmp.eq.s32.totalorder %s25, 0
      %p109 = por %p107, %p108
      %p110 = scmp.ne.s32.totalorder %s98, %s99
      %p111 = scmp.eq.s32.totalorder %s26, 1
      %p112 = por %p110, %p111
      %p114 = scmp.ne.s32.totalorder %s99, %s113
      %p115 = scmp.eq.s32.totalorder %s26, 0
      %p116 = por %p114, %p115
      %s118 = sadd.s32 %s117, 1
      %p121 = scmp.eq.s32.totalorder %s20, 1
      %p122 = scmp.ne.s32.totalorder %s117, %s119
      %p123 = scmp.eq.s32.totalorder %s20, 0
      %p124 = por %p122, %p123
      %p125 = scmp.ne.s32.totalorder %s117, %s119
      %p126 = scmp.eq.s32.totalorder %s25, 1
      %p127 = por %p125, %p126
      %p128 = scmp.ne.s32.totalorder %s119, %s120
      %p129 = scmp.eq.s32.totalorder %s25, 0
      %p130 = por %p128, %p129
      %p131 = scmp.ne.s32.totalorder %s119, %s120
      %p132 = scmp.eq.s32.totalorder %s26, 1
      %p133 = por %p131, %p132
      %p135 = scmp.ne.s32.totalorder %s120, %s134
      %p136 = scmp.eq.s32.totalorder %s26, 0
      %p137 = por %p135, %p136
      %s139 = sadd.s32 %s138, 1
      %p142 = scmp.eq.s32.totalorder %s20, 1
      %p143 = scmp.ne.s32.totalorder %s138, %s140
      %p144 = scmp.eq.s32.totalorder %s20, 0
      %p145 = por %p143, %p144
      %p146 = scmp.ne.s32.totalorder %s138, %s140
      %p147 = scmp.eq.s32.totalorder %s25, 1
      %p148 = por %p146, %p147
      %p149 = scmp.ne.s32.totalorder %s140, %s141
      %p150 = scmp.eq.s32.totalorder %s25, 0
      %p151 = por %p149, %p150
      %p152 = scmp.ne.s32.totalorder %s140, %s141
      %p153 = scmp.eq.s32.totalorder %s26, 1
      %p154 = por %p152, %p153
      %p156 = scmp.ne.s32.totalorder %s141, %s155
      %p157 = scmp.eq.s32.totalorder %s26, 0
      %p158 = por %p156, %p157
      %s160 = sadd.s32 %s159, 1
      %p163 = scmp.eq.s32.totalorder %s20, 1
      %p164 = scmp.ne.s32.totalorder %s159, %s161
      %p165 = scmp.eq.s32.totalorder %s20, 0
      %p166 = por %p164, %p165
      %p167 = scmp.ne.s32.totalorder %s159, %s161
      %p168 = scmp.eq.s32.totalorder %s25, 1
      %p169 = por %p167, %p168
      %p170 = scmp.ne.s32.totalorder %s161, %s162
      %p171 = scmp.eq.s32.totalorder %s25, 0
      %p172 = por %p170, %p171
      %p173 = scmp.ne.s32.totalorder %s161, %s162
      %p174 = scmp.eq.s32.totalorder %s26, 1
      %p175 = por %p173, %p174
      %p177 = scmp.ne.s32.totalorder %s162, %s176
      %p178 = scmp.eq.s32.totalorder %s26, 0
      %p179 = por %p177, %p178
      %s180 = ssub.s32 %s20, %s27
      %p181 = scmp.eq.s32.totalorder %s180, 0
      %s183 = sadd.s32 %s182, 1
      %s184 = scalar_select %p181, %s182, %s183
      %p187 = pneg %p181
      %p188 = scmp.eq.s32.totalorder %s20, 1
      %p189 = por %p187, %p188
      %p190 = scmp.ne.s32.totalorder %s182, %s185
      %p191 = scmp.eq.s32.totalorder %s20, 0
      %p192 = por %p190, %p191
      %p193 = scmp.ne.s32.totalorder %s182, %s185
      %p194 = scmp.eq.s32.totalorder %s25, 1
      %p195 = por %p193, %p194
      %p196 = scmp.ne.s32.totalorder %s185, %s186
      %p197 = scmp.eq.s32.totalorder %s25, 0
      %p198 = por %p196, %p197
      %p199 = scmp.ne.s32.totalorder %s185, %s186
      %p200 = scmp.eq.s32.totalorder %s26, 1
      %p201 = por %p199, %p200
      %p203 = scmp.ne.s32.totalorder %s186, %s202
      %p204 = scmp.eq.s32.totalorder %s26, 0
      %p205 = por %p203, %p204
      %p206 = scmp.le.s32.totalorder 1, %s20
      %p207 = scmp.lt.s32.totalorder %s20, 3
      %p208 = pnand %p206, %p207
      %p209 = pneg %p208
      // Predicated region
      $region9: #{tpu_custom_call.1} parent=5 // pred_check
        _
      $region10: #{tpu_custom_call.1} parent=5 // pred_check_branch
        %211 = sbr.rel (%p208) target = $region12
      $region11: #{tpu_custom_call.1} parent=5 // pred_region
        %s212 = ssub.s32 %s20, 1
        // Predicated region
        $region13: #{tpu_custom_call.1} parent=11 // pred_check
          %p213 = pneg %p67
        $region14: #{tpu_custom_call.1} parent=11 // pred_check_branch
          %215 = sbr.rel (%p213) target = $region16
        $region15: #{tpu_custom_call.1} parent=11 // pred_region
          %s217 = ssub.s32 1024, 1024
          %218 = vsyncadd [#allocation6], %s217
          %s219 = sshll.u32 [#allocation5], 4
          %s220 = int_to_ptr.vmem [resolvable:$true] %s219
          %225 = dma.hbm_to_vmem [thread:$0]  %s1, 1024, %s220, [#allocation6], 64, 64, 4
        $region16: #{tpu_custom_call.1} parent=11 // pred_fallthru
          _
        // Predicated region
        $region17: #{tpu_custom_call.1} parent=11 // pred_check
          %p226 = pneg %p88
        $region18: #{tpu_custom_call.1} parent=11 // pred_check_branch
          %228 = sbr.rel (%p226) target = $region20
        $region19: #{tpu_custom_call.1} parent=11 // pred_region
          _
        $region20: #{tpu_custom_call.1} parent=11 // pred_fallthru
          _
        // Predicated region
        $region21: #{tpu_custom_call.1} parent=11 // pred_check
          %p229 = pneg %p109
        $region22: #{tpu_custom_call.1} parent=11 // pred_check_branch
          %231 = sbr.rel (%p229) target = $region24
        $region23: #{tpu_custom_call.1} parent=11 // pred_region
          %s233 = ssub.s32 1024, 1024
          %234 = vsyncadd [#allocation6], %s233
          %s235 = sshll.u32 [#allocation7], 4
          %s236 = int_to_ptr.vmem [resolvable:$true] %s235
          %241 = dma.hbm_to_vmem [thread:$0]  %s3, 1024, %s236, [#allocation6], 64, 64, 4
        $region24: #{tpu_custom_call.1} parent=11 // pred_fallthru
          _
        // Predicated region
        $region25: #{tpu_custom_call.1} parent=11 // pred_check
          %p242 = pneg %p130
        $region26: #{tpu_custom_call.1} parent=11 // pred_check_branch
          %244 = sbr.rel (%p242) target = $region28
        $region27: #{tpu_custom_call.1} parent=11 // pred_region
          _
        $region28: #{tpu_custom_call.1} parent=11 // pred_fallthru
          _
        // Predicated region
        $region29: #{tpu_custom_call.1} parent=11 // pred_check
          %p245 = pneg %p151
        $region30: #{tpu_custom_call.1} parent=11 // pred_check_branch
          %247 = sbr.rel (%p245) target = $region32
        $region31: #{tpu_custom_call.1} parent=11 // pred_region
          _
        $region32: #{tpu_custom_call.1} parent=11 // pred_fallthru
          _
        // Predicated region
        $region33: #{tpu_custom_call.1} parent=11 // pred_check
          %p248 = pneg %p172
        $region34: #{tpu_custom_call.1} parent=11 // pred_check_branch
          %250 = sbr.rel (%p248) target = $region36
        $region35: #{tpu_custom_call.1} parent=11 // pred_region
          _
        $region36: #{tpu_custom_call.1} parent=11 // pred_fallthru
          _
      $region12: #{tpu_custom_call.1} parent=5 // pred_fallthru
        _
      %p251 = scmp.lt.s32.totalorder %s20, 2
      // Predicated region
      $region37: #{tpu_custom_call.1} parent=5 // pred_check
        %p252 = pneg %p251
      $region38: #{tpu_custom_call.1} parent=5 // pred_check_branch
        %254 = sbr.rel (%p252) target = $region40
      $region39: #{tpu_custom_call.1} parent=5 // pred_region
        // Predicated region
        $region41: #{tpu_custom_call.1} parent=39 // pred_check
          %p255 = pneg %p40
        $region42: #{tpu_custom_call.1} parent=39 // pred_check_branch
          %257 = sbr.rel (%p255) target = $region44
        $region43: #{tpu_custom_call.1} parent=39 // pred_region
          %s258 = sand.u32 %s30, 1
          %s259 = scalar_lea.sflag [#allocation3], %s258
          %s260 = sand.u32 %s30, 1
          %s261 = smul.addr %s260, 8
          %s262 = scalar_lea.vmem [#allocation2], %s261
          %s263 = smul.u32 2, %s20
          %s265 = ssub.s32 128, 128
          %266 = vsyncadd %s259, %s265
          %s267 = smul.addr %s263, 64
          %s268 = scalar_lea.hbm %s0, %s267
          %s269 = sshll.u32 %s262, 4
          %s270 = int_to_ptr.vmem [resolvable:$true] %s269
          %275 = dma.hbm_to_vmem [thread:$0]  %s268, 128, %s270, %s259, 64, 64, 4
        $region44: #{tpu_custom_call.1} parent=39 // pred_fallthru
          _
      $region40: #{tpu_custom_call.1} parent=5 // pred_fallthru
        _
      %p276 = scmp.le.s32.totalorder 1, %s20
      %p277 = scmp.lt.s32.totalorder %s20, 3
      %p278 = pnand %p276, %p277
      %p279 = pneg %p278
      // Predicated region
      $region45: #{tpu_custom_call.1} parent=5 // pred_check
        _
      $region46: #{tpu_custom_call.1} parent=5 // pred_check_branch
        %281 = sbr.rel (%p278) target = $region48
      $region47: #{tpu_custom_call.1} parent=5 // pred_region
        %s282 = ssub.s32 %s20, 1
        %s283 = sand.u32 %s33, 1
        %s284 = scalar_lea.sflag [#allocation3], %s283
        %s285 = sand.u32 %s33, 1
        %s286 = smul.addr %s285, 8
        %s287 = scalar_lea.vmem [#allocation2], %s286
        // Predicated region
        $region49: #{tpu_custom_call.1} parent=47 // pred_check
          %p288 = pneg %p46
        $region50: #{tpu_custom_call.1} parent=47 // pred_check_branch
          %290 = sbr.rel (%p288) target = $region52
        $region51: #{tpu_custom_call.1} parent=47 // pred_region
          %291 = dma.done %s284, 128
        $region52: #{tpu_custom_call.1} parent=47 // pred_fallthru
          _
        // Predicated region
        $region53: #{tpu_custom_call.1} parent=47 // pred_check
          %p292 = pneg %p67
        $region54: #{tpu_custom_call.1} parent=47 // pred_check_branch
          %294 = sbr.rel (%p292) target = $region56
        $region55: #{tpu_custom_call.1} parent=47 // pred_region
          %295 = dma.done [#allocation6], 1024
        $region56: #{tpu_custom_call.1} parent=47 // pred_fallthru
          _
        // Predicated region
        $region57: #{tpu_custom_call.1} parent=47 // pred_check
          %p296 = pneg %p109
        $region58: #{tpu_custom_call.1} parent=47 // pred_check_branch
          %298 = sbr.rel (%p296) target = $region60
        $region59: #{tpu_custom_call.1} parent=47 // pred_region
          %299 = dma.done [#allocation6], 1024
        $region60: #{tpu_custom_call.1} parent=47 // pred_fallthru
          _
        %s300 = sand.u32 %s33, 1
        %s301 = scalar_lea.sflag [#allocation3], %s300
        %s302 = sand.u32 %s33, 1
        %s303 = smul.addr %s302, 8
        %s304 = scalar_lea.vmem [#allocation2], %s303
        %p305 = pneg %p46
        %p306 = pneg %p43
        %p307 = pneg %p67
        %p308 = pneg %p64
        %p309 = pneg %p88
        %p310 = pneg %p85
        %p311 = pneg %p109
        %p312 = pneg %p106
        %p313 = pneg %p130
        %p314 = pneg %p127
        %p315 = pneg %p151
        %p316 = pneg %p148
        %p317 = pneg %p172
        %p318 = pneg %p169
        %p319 = pneg %p198
        %p320 = pneg %p195
        %s321 = sand.u32 %s185, 1
        %s322 = scalar_lea.sflag [#allocation4], %s321
        %s323 = sand.u32 %s185, 1
        %s324 = smul.addr %s323, 8
        %s325 = scalar_lea.vmem [#allocation8], %s324
        %s326 = smul.u32 2, %s25
        %s327 = smul.u32 2, %s25
        %v329 = vld [vmem:[%s287] sm:$0xf]
        %v330 = vld [vmem:[%s287 + $0x4] sm:$0xf]
        %v331 = vld [vmem:[#allocation5] sm:$0xf]
        %v332 = vld [vmem:[#allocation5 + $0x4] sm:$0xf]
        %v333 = vld [vmem:[#allocation5 + $0x8] sm:$0xf]
        %v334 = vld [vmem:[#allocation5 + $0xc] sm:$0xf]
        %v335 = vld [vmem:[#allocation5 + $0x10] sm:$0xf]
        %v336 = vld [vmem:[#allocation5 + $0x14] sm:$0xf]
        %v337 = vld [vmem:[#allocation5 + $0x18] sm:$0xf]
        %v338 = vld [vmem:[#allocation5 + $0x1c] sm:$0xf]
        %v339 = vld [vmem:[#allocation5 + $0x20] sm:$0xf]
        %v340 = vld [vmem:[#allocation5 + $0x24] sm:$0xf]
        %v341 = vld [vmem:[#allocation5 + $0x28] sm:$0xf]
        %v342 = vld [vmem:[#allocation5 + $0x2c] sm:$0xf]
        %v343 = vld [vmem:[#allocation5 + $0x30] sm:$0xf]
        %v344 = vld [vmem:[#allocation5 + $0x34] sm:$0xf]
        %v345 = vld [vmem:[#allocation5 + $0x38] sm:$0xf]
        %v346 = vld [vmem:[#allocation5 + $0x3c] sm:$0xf]
        %v347 = vld [vmem:[%s2] sm:$0x1]
        %v349 = vlaneseq
        %v350 = vshrl.u32 %v349, 7
        %v351 = vsub.s32 0, %v350
        %v352 = vrot.slane %v347, %v351
        %v356 = vunpack.c.l.b16 %v329
        %v357 = vunpack.c.l.b16 %v330
        %v358 = vpack.c.b16 %v357, %v356
        %v376 = vunpack.c.l.b16 %v331
        %v377 = vunpack.c.l.b16 %v332
        %v378 = vunpack.c.l.b16 %v333
        %v379 = vunpack.c.l.b16 %v334
        %v380 = vunpack.c.l.b16 %v335
        %v381 = vunpack.c.l.b16 %v336
        %v382 = vunpack.c.l.b16 %v337
        %v383 = vunpack.c.l.b16 %v338
        %v384 = vunpack.c.l.b16 %v339
        %v385 = vunpack.c.l.b16 %v340
        %v386 = vunpack.c.l.b16 %v341
        %v387 = vunpack.c.l.b16 %v342
        %v388 = vunpack.c.l.b16 %v343
        %v389 = vunpack.c.l.b16 %v344
        %v390 = vunpack.c.l.b16 %v345
        %v391 = vunpack.c.l.b16 %v346
        %v392 = vpack.c.b16 %v377, %v376
        %v393 = vpack.c.b16 %v379, %v378
        %v394 = vpack.c.b16 %v381, %v380
        %v395 = vpack.c.b16 %v383, %v382
        %v396 = vpack.c.b16 %v385, %v384
        %v397 = vpack.c.b16 %v387, %v386
        %v398 = vpack.c.b16 %v389, %v388
        %v399 = vpack.c.b16 %v391, %v390
        %408 = vmatprep.subr.bf16.mxu0 0
        %409 = vmatpush1.bf16.msra.mxu0 %v392
        %410 = vmatprep.subr.bf16.mxu0 0
        %411 = vmatpush1.bf16.msra.mxu0 %v393
        %412 = vmatprep.subr.bf16.mxu0 0
        %413 = vmatpush1.bf16.msra.mxu0 %v394
        %414 = vmatprep.subr.bf16.mxu0 0
        %415 = vmatpush1.bf16.msra.mxu0 %v395
        %416 = vmatprep.subr.bf16.mxu0 0
        %417 = vmatpush1.bf16.msra.mxu0 %v396
        %418 = vmatprep.subr.bf16.mxu0 0
        %419 = vmatpush1.bf16.msra.mxu0 %v397
        %420 = vmatprep.subr.bf16.mxu0 0
        %421 = vmatpush1.bf16.msra.mxu0 %v398
        %422 = vmatprep.subr.bf16.mxu0 0
        %423 = vmatpush1.bf16.msra.mxu0 %v399
        %424 = vmatprep.subr.bf16.mxu0 0
        %425 = vmatpush1.bf16.msra.mxu0 0
        %426 = vmatprep.subr.bf16.mxu0 0
        %427 = vmatpush1.bf16.msra.mxu0 0
        %428 = vmatprep.subr.bf16.mxu0 0
        %429 = vmatpush1.bf16.msra.mxu0 0
        %430 = vmatprep.subr.bf16.mxu0 0
        %431 = vmatpush1.bf16.msra.mxu0 0
        %432 = vmatprep.subr.bf16.mxu0 0
        %433 = vmatpush1.bf16.msra.mxu0 0
        %434 = vmatprep.subr.bf16.mxu0 0
        %435 = vmatpush1.bf16.msra.mxu0 0
        %436 = vmatprep.subr.bf16.mxu0 0
        %437 = vmatpush1.bf16.msra.mxu0 0
        %438 = vmatprep.subr.bf16.mxu0 0
        %439 = vmatpush1.bf16.msra.mxu0 0
        %440 = vmatprep.mubr.bf16.mxu0 0
        %441 = vmatmul.mubr.bf16.gmra.mrb[0].mxu0 %v358
        %v442 = vpop.f32.mrb[0].mxu0
        %v443 = vadd.f32 %v352, %v442
        %v444 = vpop.f32.mrb[0].mxu0
        %v445 = vpop.f32.mrb[0].mxu0
        %v446 = vadd.f32 %v352, %v445
        %v447 = vpop.f32.mrb[0].mxu0
        %448 = vdwg.mxu0
        %v449 = vmul.f32 %v443, 0.5
        %v450 = vmul.f32 %v446, 0.5
        %v451 = vmul.f32 %v443, 0.70710677
        %v452 = vmul.f32 %v446, 0.70710677
        %v453 = verf.f32.pop %v451
        %v454 = verf.f32.pop %v452
        %v455 = vadd.f32 %v453, 1.0
        %v456 = vadd.f32 %v454, 1.0
        %v457 = vmul.f32 %v449, %v455
        %v458 = vmul.f32 %v450, %v456
        %v459 = vpack.c.bf16 %v458, %v457
        %v460 = vld [vmem:[#allocation7] sm:$0xf]
        %v461 = vld [vmem:[#allocation7 + $0x4] sm:$0xf]
        %v462 = vld [vmem:[#allocation7 + $0x8] sm:$0xf]
        %v463 = vld [vmem:[#allocation7 + $0xc] sm:$0xf]
        %v464 = vld [vmem:[#allocation7 + $0x10] sm:$0xf]
        %v465 = vld [vmem:[#allocation7 + $0x14] sm:$0xf]
        %v466 = vld [vmem:[#allocation7 + $0x18] sm:$0xf]
        %v467 = vld [vmem:[#allocation7 + $0x1c] sm:$0xf]
        %v468 = vld [vmem:[#allocation7 + $0x20] sm:$0xf]
        %v469 = vld [vmem:[#allocation7 + $0x24] sm:$0xf]
        %v470 = vld [vmem:[#allocation7 + $0x28] sm:$0xf]
        %v471 = vld [vmem:[#allocation7 + $0x2c] sm:$0xf]
        %v472 = vld [vmem:[#allocation7 + $0x30] sm:$0xf]
        %v473 = vld [vmem:[#allocation7 + $0x34] sm:$0xf]
        %v474 = vld [vmem:[#allocation7 + $0x38] sm:$0xf]
        %v475 = vld [vmem:[#allocation7 + $0x3c] sm:$0xf]
        %v476 = vld [vmem:[%s4] sm:$0x1]
        %v478 = vlaneseq
        %v479 = vshrl.u32 %v478, 7
        %v480 = vsub.s32 0, %v479
        %v481 = vrot.slane %v476, %v480
        %v499 = vunpack.c.l.b16 %v460
        %v500 = vunpack.c.l.b16 %v461
        %v501 = vunpack.c.l.b16 %v462
        %v502 = vunpack.c.l.b16 %v463
        %v503 = vunpack.c.l.b16 %v464
        %v504 = vunpack.c.l.b16 %v465
        %v505 = vunpack.c.l.b16 %v466
        %v506 = vunpack.c.l.b16 %v467
        %v507 = vunpack.c.l.b16 %v468
        %v508 = vunpack.c.l.b16 %v469
        %v509 = vunpack.c.l.b16 %v470
        %v510 = vunpack.c.l.b16 %v471
        %v511 = vunpack.c.l.b16 %v472
        %v512 = vunpack.c.l.b16 %v473
        %v513 = vunpack.c.l.b16 %v474
        %v514 = vunpack.c.l.b16 %v475
        %v515 = vpack.c.b16 %v500, %v499
        %v516 = vpack.c.b16 %v502, %v501
        %v517 = vpack.c.b16 %v504, %v503
        %v518 = vpack.c.b16 %v506, %v505
        %v519 = vpack.c.b16 %v508, %v507
        %v520 = vpack.c.b16 %v510, %v509
        %v521 = vpack.c.b16 %v512, %v511
        %v522 = vpack.c.b16 %v514, %v513
        %531 = vmatprep.subr.bf16.mxu0 0
        %532 = vmatpush1.bf16.msra.mxu0 %v515
        %533 = vmatprep.subr.bf16.mxu0 0
        %534 = vmatpush1.bf16.msra.mxu0 %v516
        %535 = vmatprep.subr.bf16.mxu0 0
        %536 = vmatpush1.bf16.msra.mxu0 %v517
        %537 = vmatprep.subr.bf16.mxu0 0
        %538 = vmatpush1.bf16.msra.mxu0 %v518
        %539 = vmatprep.subr.bf16.mxu0 0
        %540 = vmatpush1.bf16.msra.mxu0 %v519
        %541 = vmatprep.subr.bf16.mxu0 0
        %542 = vmatpush1.bf16.msra.mxu0 %v520
        %543 = vmatprep.subr.bf16.mxu0 0
        %544 = vmatpush1.bf16.msra.mxu0 %v521
        %545 = vmatprep.subr.bf16.mxu0 0
        %546 = vmatpush1.bf16.msra.mxu0 %v522
        %547 = vmatprep.subr.bf16.mxu0 0
        %548 = vmatpush1.bf16.msra.mxu0 0
        %549 = vmatprep.subr.bf16.mxu0 0
        %550 = vmatpush1.bf16.msra.mxu0 0
        %551 = vmatprep.subr.bf16.mxu0 0
        %552 = vmatpush1.bf16.msra.mxu0 0
        %553 = vmatprep.subr.bf16.mxu0 0
        %554 = vmatpush1.bf16.msra.mxu0 0
        %555 = vmatprep.subr.bf16.mxu0 0
        %556 = vmatpush1.bf16.msra.mxu0 0
        %557 = vmatprep.subr.bf16.mxu0 0
        %558 = vmatpush1.bf16.msra.mxu0 0
        %559 = vmatprep.subr.bf16.mxu0 0
        %560 = vmatpush1.bf16.msra.mxu0 0
        %561 = vmatprep.subr.bf16.mxu0 0
        %562 = vmatpush1.bf16.msra.mxu0 0
        %563 = vmatprep.mubr.bf16.mxu0 0
        %564 = vmatmul.mubr.bf16.gmra.mrb[0].mxu0 %v459
        %v565 = vpop.f32.mrb[0].mxu0
        %v566 = vadd.f32 %v481, %v565
        %v567 = vpop.f32.mrb[0].mxu0
        %v568 = vpop.f32.mrb[0].mxu0
        %v569 = vadd.f32 %v481, %v568
        %v570 = vpop.f32.mrb[0].mxu0
        %571 = vdwg.mxu0
        %v572 = vadd.f32 %v566, %v443
        %v573 = vadd.f32 %v569, %v446
        %v574 = vld [vmem:[%s5] sm:$0x1]
        %v575 = vld [vmem:[%s6] sm:$0x1]
        %576 = vadd.xlane.f32.xlu0 %v572
        %v577 = vpop.xlane.xlu0 %576
        %578 = vadd.xlane.f32.xlu0 %v573
        %v579 = vpop.xlane.xlu0 %578
        %v580 = vrcp.pop 128.0
        %v581 = vmul.f32 %v577, %v580
        %v582 = vmul.f32 %v579, %v580
        %v583 = vsub.f32 %v572, %v581
        %v584 = vsub.f32 %v573, %v582
        %v585 = vmul.f32 %v583, %v583
        %v586 = vmul.f32 %v584, %v584
        %587 = vadd.xlane.f32.xlu0 %v585
        %v588 = vpop.xlane.xlu0 %587
        %589 = vadd.xlane.f32.xlu0 %v586
        %v590 = vpop.xlane.xlu0 %589
        %v591 = vmul.f32 %v588, %v580
        %v592 = vmul.f32 %v590, %v580
        %v593 = vadd.f32 %v591, 1e-05
        %v594 = vadd.f32 %v592, 1e-05
        %v595 = vrsqrt.pop %v593
        %v596 = vrsqrt.pop %v594
        %v597 = vmul.f32 %v583, %v595
        %v598 = vmul.f32 %v584, %v596
        %v600 = vlaneseq
        %v601 = vshrl.u32 %v600, 7
        %v602 = vsub.s32 0, %v601
        %v603 = vrot.slane %v574, %v602
        %v605 = vmul.f32 %v597, %v603
        %v606 = vmul.f32 %v598, %v603
        %v608 = vlaneseq
        %v609 = vshrl.u32 %v608, 7
        %v610 = vsub.s32 0, %v609
        %v611 = vrot.slane %v575, %v610
        %v613 = vadd.f32 %v605, %v611
        %v614 = vadd.f32 %v606, %v611
        %v615 = vpack.c.bf16 %v614, %v613
        %v617 = vunpack.c.l.b16 %v615
        %v618 = vunpack.c.h.b16 %v615
        %v619 = vpack.c.b16 %v617, %v617
        %v620 = vpack.c.b16 %v618, %v618
        %623 = vst [vmem:[%s325] sm:$0xf] %v619
        %624 = vst [vmem:[%s325 + $0x4] sm:$0xf] %v620
        %s625 = sand.u32 %s185, 1
        %s626 = scalar_lea.sflag [#allocation4], %s625
        %s627 = sand.u32 %s185, 1
        %s628 = smul.addr %s627, 8
        %s629 = scalar_lea.vmem [#allocation8], %s628
        // Predicated region
        $region61: #{tpu_custom_call.1} parent=47 // pred_check
          %p630 = pneg %p195
        $region62: #{tpu_custom_call.1} parent=47 // pred_check_branch
          %632 = sbr.rel (%p630) target = $region64
        $region63: #{tpu_custom_call.1} parent=47 // pred_region
          %s633 = smul.u32 2, %s25
          %s635 = ssub.s32 128, 128
          %636 = vsyncadd %s626, %s635
          %s637 = smul.addr %s633, 64
          %s638 = scalar_lea.hbm %s7, %s637
          %s639 = sshll.u32 %s629, 4
          %s640 = int_to_ptr.vmem [resolvable:$true] %s639
          %645 = dma.vmem_to_hbm [thread:$0]  %s640, 128, %s638, %s626, 64, 64, 4
        $region64: #{tpu_custom_call.1} parent=47 // pred_fallthru
          _
      $region48: #{tpu_custom_call.1} parent=5 // pred_fallthru
        _
      %p646 = scmp.le.s32.totalorder 2, %s20
      // Predicated region
      $region65: #{tpu_custom_call.1} parent=5 // pred_check
        %p647 = pneg %p646
      $region66: #{tpu_custom_call.1} parent=5 // pred_check_branch
        %649 = sbr.rel (%p647) target = $region68
      $region67: #{tpu_custom_call.1} parent=5 // pred_region
        %s650 = ssub.s32 %s20, 2
        // Predicated region
        $region69: #{tpu_custom_call.1} parent=67 // pred_check
          %p651 = pneg %p201
        $region70: #{tpu_custom_call.1} parent=67 // pred_check_branch
          %653 = sbr.rel (%p651) target = $region72
        $region71: #{tpu_custom_call.1} parent=67 // pred_region
          %s654 = sand.u32 %s186, 1
          %s655 = scalar_lea.sflag [#allocation4], %s654
          %s656 = sand.u32 %s186, 1
          %s657 = smul.addr %s656, 8
          %s658 = scalar_lea.vmem [#allocation8], %s657
          %659 = dma.done %s655, 128
        $region72: #{tpu_custom_call.1} parent=67 // pred_fallthru
          _
      $region68: #{tpu_custom_call.1} parent=5 // pred_fallthru
        _
    $region6: #{tpu_custom_call.1} parent=1 // loop_footer
      %s24 = sadd.s32 1, %s20
    $region7: #{tpu_custom_call.1} parent=1 // loop_footer_branch
      %19 = sbr.rel target = $region3
    $region8: #{tpu_custom_call.1} parent=1 // loop_exit
      _
    %660 = vsyncpa [#allocation3], 1
    %s661 = scalar_lea.sflag [#allocation3], 1
    %662 = vsyncpa %s661, 1
    %663 = vsyncpa [#allocation6], 1
    %664 = vsyncpa [#allocation4], 1
    %s665 = scalar_lea.sflag [#allocation4], 1
    %666 = vsyncpa %s665, 1

// kernel: tpu_custom_call.1
$region0: #{tpu_custom_call.1}
  #allocation0 [shape = 'u32[]', space=smem, size = 0x4, offset = 0x4, fixed_abs, tag = 'smem constant byte address 0x4 - core index']
  #allocation1 [shape = 'u32[144,128]{1,0:T(1,128)}', space=vmem, size = 0x12000, scoped, tag = 'internal scratch']
  %s0 = inlined_call_operand.hbm [shape: bf16[32,128], index: 0, kind: input, shape index: {}]
  %s1 = inlined_call_operand.hbm [shape: bf16[128,128], index: 1, kind: input, shape index: {}]
  %s2 = inlined_call_operand.vmem [shape: f32[1,128], index: 2, kind: input, shape index: {}]
  %s3 = inlined_call_operand.hbm [shape: bf16[128,128], index: 3, kind: input, shape index: {}]
  %s4 = inlined_call_operand.vmem [shape: f32[1,128], index: 4, kind: input, shape index: {}]
  %s5 = inlined_call_operand.vmem [shape: f32[1,128], index: 5, kind: input, shape index: {}]
  %s6 = inlined_call_operand.vmem [shape: f32[1,128], index: 6, kind: input, shape index: {}]
  %s7 = inlined_call_operand.hbm [shape: bf16[32,128], index: 7, kind: output, shape index: {}]
  %s8 = sld [smem:[#allocation0]]
  $region73: #{tpu_custom_call.1} parent=0
    _
  %s10 = ssub.s32 1, %s8
  %s11 = scalar_select 0, %s10, %s8
  $region1: #{tpu_custom_call.1} parent=0
    #allocation2 [shape = 'u8[8192]{0}', space=vmem, size = 0x2000, scoped, tag = 'input window, operand 0']
    #allocation3 [shape = 's32[2]{0}', space=sflag, size = 0x8, scoped, tag = 'scoped memory for tpu_custom_call.1']
    #allocation4 [shape = 's32[2]{0}', space=sflag, size = 0x8, scoped, tag = 'scoped memory for tpu_custom_call.1']
    #allocation5 [shape = 'u8[32768]{0}', space=vmem, size = 0x8000, scoped, tag = 'input window, operand 1, single buffered']
    #allocation6 [shape = 's32[1]{0}', space=sflag, size = 0x4, scoped, tag = 'scoped memory for tpu_custom_call.1']
    #allocation7 [shape = 'u8[32768]{0}', space=vmem, size = 0x8000, scoped, tag = 'input window, operand 3, single buffered']
    #allocation8 [shape = 'u8[8192]{0}', space=vmem, size = 0x2000, scoped, tag = 'output window, operand 0']
    %12 = vsyncpa [#allocation3], 0
    %s13 = scalar_lea.sflag [#allocation3], 1
    %14 = vsyncpa %s13, 0
    %15 = vsyncpa [#allocation6], 0
    %16 = vsyncpa [#allocation4], 0
    %s17 = scalar_lea.sflag [#allocation4], 1
    %18 = vsyncpa %s17, 0
    loop: start=0, step=1, limit=4
    $region2: #{tpu_custom_call.1} parent=1 // loop_pre_header
      _
    $region3: #{tpu_custom_call.1} parent=1 // loop_header
      %s20 = sphi 0, %s24
      %p21 = scmp.ge.s32.totalorder %s20, 4
      %s30 = sphi 0, %s32
      %s33 = sphi 0, %s30
      %s34 = sphi 0, %s33
      %s50 = sphi 0, %s34
      %s54 = sphi 0, %s54
      %s56 = sphi 0, %s54
      %s57 = sphi 0, %s56
      %s71 = sphi 0, %s57
      %s75 = sphi 0, %s75
      %s77 = sphi 0, %s75
      %s78 = sphi 0, %s77
      %s92 = sphi 0, %s78
      %s96 = sphi 0, %s96
      %s98 = sphi 0, %s96
      %s99 = sphi 0, %s98
      %s113 = sphi 0, %s99
      %s117 = sphi 0, %s117
      %s119 = sphi 0, %s117
      %s120 = sphi 0, %s119
      %s134 = sphi 0, %s120
      %s138 = sphi 0, %s138
      %s140 = sphi 0, %s138
      %s141 = sphi 0, %s140
      %s155 = sphi 0, %s141
      %s159 = sphi 0, %s159
      %s161 = sphi 0, %s159
      %s162 = sphi 0, %s161
      %s176 = sphi 0, %s162
      %s182 = sphi 0, %s184
      %s185 = sphi 0, %s182
      %s186 = sphi 0, %s185
      %s202 = sphi 0, %s186
    $region4: #{tpu_custom_call.1} parent=1 // loop_header_branch
      %23 = sbr.rel (%p21) target = $region8
    $region5: #{tpu_custom_call.1} parent=1 // loop_body
      %s25 = ssub.s32 %s20, 1
      %s26 = ssub.s32 %s20, 2
      %s27 = sadd.s32 %s20, 1
      %s28 = ssub.s32 %s20, %s27
      %p29 = scmp.eq.s32.totalorder %s28, 0
      %s31 = sadd.s32 %s30, 1
      %s32 = scalar_select %p29, %s30, %s31
      %p35 = pneg %p29
      %p36 = scmp.eq.s32.totalorder %s20, 1
      %p37 = por %p35, %p36
      %p38 = scmp.ne.s32.totalorder %s30, %s33
      %p39 = scmp.eq.s32.totalorder %s20, 0
      %p40 = por %p38, %p39
      %p41 = scmp.ne.s32.totalorder %s30, %s33
      %p42 = scmp.eq.s32.totalorder %s25, 1
      %p43 = por %p41, %p42
      %p44 = scmp.ne.s32.totalorder %s33, %s34
      %p45 = scmp.eq.s32.totalorder %s25, 0
      %p46 = por %p44, %p45
      %p47 = scmp.ne.s32.totalorder %s33, %s34
      %p48 = scmp.eq.s32.totalorder %s26, 1
      %p49 = por %p47, %p48
      %p51 = scmp.ne.s32.totalorder %s34, %s50
      %p52 = scmp.eq.s32.totalorder %s26, 0
      %p53 = por %p51, %p52
      %s55 = sadd.s32 %s54, 1
      %p58 = scmp.eq.s32.totalorder %s20, 1
      %p59 = scmp.ne.s32.totalorder %s54, %s56
      %p60 = scmp.eq.s32.totalorder %s20, 0
      %p61 = por %p59, %p60
      %p62 = scmp.ne.s32.totalorder %s54, %s56
      %p63 = scmp.eq.s32.totalorder %s25, 1
      %p64 = por %p62, %p63
      %p65 = scmp.ne.s32.totalorder %s56, %s57
      %p66 = scmp.eq.s32.totalorder %s25, 0
      %p67 = por %p65, %p66
      %p68 = scmp.ne.s32.totalorder %s56, %s57
      %p69 = scmp.eq.s32.totalorder %s26, 1
      %p70 = por %p68, %p69
      %p72 = scmp.ne.s32.totalorder %s57, %s71
      %p73 = scmp.eq.s32.totalorder %s26, 0
      %p74 = por %p72, %p73
      %s76 = sadd.s32 %s75, 1
      %p79 = scmp.eq.s32.totalorder %s20, 1
      %p80 = scmp.ne.s32.totalorder %s75, %s77
      %p81 = scmp.eq.s32.totalorder %s20, 0
      %p82 = por %p80, %p81
      %p83 = scmp.ne.s32.totalorder %s75, %s77
      %p84 = scmp.eq.s32.totalorder %s25, 1
      %p85 = por %p83, %p84
      %p86 = scmp.ne.s32.totalorder %s77, %s78
      %p87 = scmp.eq.s32.totalorder %s25, 0
      %p88 = por %p86, %p87
      %p89 = scmp.ne.s32.totalorder %s77, %s78
      %p90 = scmp.eq.s32.totalorder %s26, 1
      %p91 = por %p89, %p90
      %p93 = scmp.ne.s32.totalorder %s78, %s92
      %p94 = scmp.eq.s32.totalorder %s26, 0
      %p95 = por %p93, %p94
      %s97 = sadd.s32 %s96, 1
      %p100 = scmp.eq.s32.totalorder %s20, 1
      %p101 = scmp.ne.s32.totalorder %s96, %s98
      %p102 = scmp.eq.s32.totalorder %s20, 0
      %p103 = por %p101, %p102
      %p104 = scmp.ne.s32.totalorder %s96, %s98
      %p105 = scmp.eq.s32.totalorder %s25, 1
      %p106 = por %p104, %p105
      %p107 = scmp.ne.s32.totalorder %s98, %s99
      %p108 = scmp.eq.s32.totalorder %s25, 0
      %p109 = por %p107, %p108
      %p110 = scmp.ne.s32.totalorder %s98, %s99
      %p111 = scmp.eq.s32.totalorder %s26, 1
      %p112 = por %p110, %p111
      %p114 = scmp.ne.s32.totalorder %s99, %s113
      %p115 = scmp.eq.s32.totalorder %s26, 0
      %p116 = por %p114, %p115
      %s118 = sadd.s32 %s117, 1
      %p121 = scmp.eq.s32.totalorder %s20, 1
      %p122 = scmp.ne.s32.totalorder %s117, %s119
      %p123 = scmp.eq.s32.totalorder %s20, 0
      %p124 = por %p122, %p123
      %p125 = scmp.ne.s32.totalorder %s117, %s119
      %p126 = scmp.eq.s32.totalorder %s25, 1
      %p127 = por %p125, %p126
      %p128 = scmp.ne.s32.totalorder %s119, %s120
      %p129 = scmp.eq.s32.totalorder %s25, 0
      %p130 = por %p128, %p129
      %p131 = scmp.ne.s32.totalorder %s119, %s120
      %p132 = scmp.eq.s32.totalorder %s26, 1
      %p133 = por %p131, %p132
      %p135 = scmp.ne.s32.totalorder %s120, %s134
      %p136 = scmp.eq.s32.totalorder %s26, 0
      %p137 = por %p135, %p136
      %s139 = sadd.s32 %s138, 1
      %p142 = scmp.eq.s32.totalorder %s20, 1
      %p143 = scmp.ne.s32.totalorder %s138, %s140
      %p144 = scmp.eq.s32.totalorder %s20, 0
      %p145 = por %p143, %p144
      %p146 = scmp.ne.s32.totalorder %s138, %s140
      %p147 = scmp.eq.s32.totalorder %s25, 1
      %p148 = por %p146, %p147
      %p149 = scmp.ne.s32.totalorder %s140, %s141
      %p150 = scmp.eq.s32.totalorder %s25, 0
      %p151 = por %p149, %p150
      %p152 = scmp.ne.s32.totalorder %s140, %s141
      %p153 = scmp.eq.s32.totalorder %s26, 1
      %p154 = por %p152, %p153
      %p156 = scmp.ne.s32.totalorder %s141, %s155
      %p157 = scmp.eq.s32.totalorder %s26, 0
      %p158 = por %p156, %p157
      %s160 = sadd.s32 %s159, 1
      %p163 = scmp.eq.s32.totalorder %s20, 1
      %p164 = scmp.ne.s32.totalorder %s159, %s161
      %p165 = scmp.eq.s32.totalorder %s20, 0
      %p166 = por %p164, %p165
      %p167 = scmp.ne.s32.totalorder %s159, %s161
      %p168 = scmp.eq.s32.totalorder %s25, 1
      %p169 = por %p167, %p168
      %p170 = scmp.ne.s32.totalorder %s161, %s162
      %p171 = scmp.eq.s32.totalorder %s25, 0
      %p172 = por %p170, %p171
      %p173 = scmp.ne.s32.totalorder %s161, %s162
      %p174 = scmp.eq.s32.totalorder %s26, 1
      %p175 = por %p173, %p174
      %p177 = scmp.ne.s32.totalorder %s162, %s176
      %p178 = scmp.eq.s32.totalorder %s26, 0
      %p179 = por %p177, %p178
      %s180 = ssub.s32 %s20, %s27
      %p181 = scmp.eq.s32.totalorder %s180, 0
      %s183 = sadd.s32 %s182, 1
      %s184 = scalar_select %p181, %s182, %s183
      %p187 = pneg %p181
      %p188 = scmp.eq.s32.totalorder %s20, 1
      %p189 = por %p187, %p188
      %p190 = scmp.ne.s32.totalorder %s182, %s185
      %p191 = scmp.eq.s32.totalorder %s20, 0
      %p192 = por %p190, %p191
      %p193 = scmp.ne.s32.totalorder %s182, %s185
      %p194 = scmp.eq.s32.totalorder %s25, 1
      %p195 = por %p193, %p194
      %p196 = scmp.ne.s32.totalorder %s185, %s186
      %p197 = scmp.eq.s32.totalorder %s25, 0
      %p198 = por %p196, %p197
      %p199 = scmp.ne.s32.totalorder %s185, %s186
      %p200 = scmp.eq.s32.totalorder %s26, 1
      %p201 = por %p199, %p200
      %p203 = scmp.ne.s32.totalorder %s186, %s202
      %p204 = scmp.eq.s32.totalorder %s26, 0
      %p205 = por %p203, %p204
      %p206 = scmp.le.s32.totalorder 1, %s20
      %p207 = scmp.lt.s32.totalorder %s20, 3
      %p208 = pnand %p206, %p207
      %p209 = pneg %p208
      // Predicated region
      $region9: #{tpu_custom_call.1} parent=5 // pred_check
        _
      $region10: #{tpu_custom_call.1} parent=5 // pred_check_branch
        %211 = sbr.rel (%p208) target = $region12
      $region11: #{tpu_custom_call.1} parent=5 // pred_region
        %s212 = ssub.s32 %s20, 1
        // Predicated region
        $region13: #{tpu_custom_call.1} parent=11 // pred_check
          %p213 = pneg %p67
        $region14: #{tpu_custom_call.1} parent=11 // pred_check_branch
          %215 = sbr.rel (%p213) target = $region16
        $region15: #{tpu_custom_call.1} parent=11 // pred_region
          %s217 = ssub.s32 1024, 1024
          %218 = vsyncadd [#allocation6], %s217
          %s219 = sshll.u32 [#allocation5], 4
          %s220 = int_to_ptr.vmem [resolvable:$true] %s219
          %225 = dma.hbm_to_vmem [thread:$0]  %s1, 1024, %s220, [#allocation6], 64, 64, 4
        $region16: #{tpu_custom_call.1} parent=11 // pred_fallthru
          _
        // Predicated region
        $region17: #{tpu_custom_call.1} parent=11 // pred_check
          %p226 = pneg %p88
        $region18: #{tpu_custom_call.1} parent=11 // pred_check_branch
          %228 = sbr.rel (%p226) target = $region20
        $region19: #{tpu_custom_call.1} parent=11 // pred_region
          _
        $region20: #{tpu_custom_call.1} parent=11 // pred_fallthru
          _
        // Predicated region
        $region21: #{tpu_custom_call.1} parent=11 // pred_check
          %p229 = pneg %p109
        $region22: #{tpu_custom_call.1} parent=11 // pred_check_branch
          %231 = sbr.rel (%p229) target = $region24
        $region23: #{tpu_custom_call.1} parent=11 // pred_region
          %s233 = ssub.s32 1024, 1024
          %234 = vsyncadd [#allocation6], %s233
          %s235 = sshll.u32 [#allocation7], 4
          %s236 = int_to_ptr.vmem [resolvable:$true] %s235
          %241 = dma.hbm_to_vmem [thread:$0]  %s3, 1024, %s236, [#allocation6], 64, 64, 4
        $region24: #{tpu_custom_call.1} parent=11 // pred_fallthru
          _
        // Predicated region
        $region25: #{tpu_custom_call.1} parent=11 // pred_check
          %p242 = pneg %p130
        $region26: #{tpu_custom_call.1} parent=11 // pred_check_branch
          %244 = sbr.rel (%p242) target = $region28
        $region27: #{tpu_custom_call.1} parent=11 // pred_region
          _
        $region28: #{tpu_custom_call.1} parent=11 // pred_fallthru
          _
        // Predicated region
        $region29: #{tpu_custom_call.1} parent=11 // pred_check
          %p245 = pneg %p151
        $region30: #{tpu_custom_call.1} parent=11 // pred_check_branch
          %247 = sbr.rel (%p245) target = $region32
        $region31: #{tpu_custom_call.1} parent=11 // pred_region
          _
        $region32: #{tpu_custom_call.1} parent=11 // pred_fallthru
          _
        // Predicated region
        $region33: #{tpu_custom_call.1} parent=11 // pred_check
          %p248 = pneg %p172
        $region34: #{tpu_custom_call.1} parent=11 // pred_check_branch
          %250 = sbr.rel (%p248) target = $region36
        $region35: #{tpu_custom_call.1} parent=11 // pred_region
          _
        $region36: #{tpu_custom_call.1} parent=11 // pred_fallthru
          _
      $region12: #{tpu_custom_call.1} parent=5 // pred_fallthru
        _
      %p251 = scmp.lt.s32.totalorder %s20, 2
      // Predicated region
      $region37: #{tpu_custom_call.1} parent=5 // pred_check
        %p252 = pneg %p251
      $region38: #{tpu_custom_call.1} parent=5 // pred_check_branch
        %254 = sbr.rel (%p252) target = $region40
      $region39: #{tpu_custom_call.1} parent=5 // pred_region
        // Predicated region
        $region41: #{tpu_custom_call.1} parent=39 // pred_check
          %p255 = pneg %p40
        $region42: #{tpu_custom_call.1} parent=39 // pred_check_branch
          %257 = sbr.rel (%p255) target = $region44
        $region43: #{tpu_custom_call.1} parent=39 // pred_region
          %s258 = sand.u32 %s30, 1
          %s259 = scalar_lea.sflag [#allocation3], %s258
          %s260 = sand.u32 %s30, 1
          %s261 = smul.addr %s260, 8
          %s262 = scalar_lea.vmem [#allocation2], %s261
          %s263 = smul.u32 2, %s20
          %s265 = ssub.s32 128, 128
          %266 = vsyncadd %s259, %s265
          %s267 = smul.addr %s263, 64
          %s268 = scalar_lea.hbm %s0, %s267
          %s269 = sshll.u32 %s262, 4
          %s270 = int_to_ptr.vmem [resolvable:$true] %s269
          %275 = dma.hbm_to_vmem [thread:$0]  %s268, 128, %s270, %s259, 64, 64, 4
        $region44: #{tpu_custom_call.1} parent=39 // pred_fallthru
          _
      $region40: #{tpu_custom_call.1} parent=5 // pred_fallthru
        _
      %p276 = scmp.le.s32.totalorder 1, %s20
      %p277 = scmp.lt.s32.totalorder %s20, 3
      %p278 = pnand %p276, %p277
      %p279 = pneg %p278
      // Predicated region
      $region45: #{tpu_custom_call.1} parent=5 // pred_check
        _
      $region46: #{tpu_custom_call.1} parent=5 // pred_check_branch
        %281 = sbr.rel (%p278) target = $region48
      $region47: #{tpu_custom_call.1} parent=5 // pred_region
        %s282 = ssub.s32 %s20, 1
        %s283 = sand.u32 %s33, 1
        %s284 = scalar_lea.sflag [#allocation3], %s283
        %s285 = sand.u32 %s33, 1
        %s286 = smul.addr %s285, 8
        %s287 = scalar_lea.vmem [#allocation2], %s286
        // Predicated region
        $region49: #{tpu_custom_call.1} parent=47 // pred_check
          %p288 = pneg %p46
        $region50: #{tpu_custom_call.1} parent=47 // pred_check_branch
          %290 = sbr.rel (%p288) target = $region52
        $region51: #{tpu_custom_call.1} parent=47 // pred_region
          %291 = dma.done %s284, 128
        $region52: #{tpu_custom_call.1} parent=47 // pred_fallthru
          _
        // Predicated region
        $region53: #{tpu_custom_call.1} parent=47 // pred_check
          %p292 = pneg %p67
        $region54: #{tpu_custom_call.1} parent=47 // pred_check_branch
          %294 = sbr.rel (%p292) target = $region56
        $region55: #{tpu_custom_call.1} parent=47 // pred_region
          %295 = dma.done [#allocation6], 1024
        $region56: #{tpu_custom_call.1} parent=47 // pred_fallthru
          _
        // Predicated region
        $region57: #{tpu_custom_call.1} parent=47 // pred_check
          %p296 = pneg %p109
        $region58: #{tpu_custom_call.1} parent=47 // pred_check_branch
          %298 = sbr.rel (%p296) target = $region60
        $region59: #{tpu_custom_call.1} parent=47 // pred_region
          %299 = dma.done [#allocation6], 1024
        $region60: #{tpu_custom_call.1} parent=47 // pred_fallthru
          _
        %s300 = sand.u32 %s33, 1
        %s301 = scalar_lea.sflag [#allocation3], %s300
        %s302 = sand.u32 %s33, 1
        %s303 = smul.addr %s302, 8
        %s304 = scalar_lea.vmem [#allocation2], %s303
        %p305 = pneg %p46
        %p306 = pneg %p43
        %p307 = pneg %p67
        %p308 = pneg %p64
        %p309 = pneg %p88
        %p310 = pneg %p85
        %p311 = pneg %p109
        %p312 = pneg %p106
        %p313 = pneg %p130
        %p314 = pneg %p127
        %p315 = pneg %p151
        %p316 = pneg %p148
        %p317 = pneg %p172
        %p318 = pneg %p169
        %p319 = pneg %p198
        %p320 = pneg %p195
        %s321 = sand.u32 %s185, 1
        %s322 = scalar_lea.sflag [#allocation4], %s321
        %s323 = sand.u32 %s185, 1
        %s324 = smul.addr %s323, 8
        %s325 = scalar_lea.vmem [#allocation8], %s324
        %s326 = smul.u32 2, %s25
        %s327 = smul.u32 2, %s25
        %v329 = vld [vmem:[%s287] sm:$0xf]
        %v330 = vld [vmem:[%s287 + $0x4] sm:$0xf]
        %v331 = vld [vmem:[#allocation5] sm:$0xf]
        %v332 = vld [vmem:[#allocation5 + $0x4] sm:$0xf]
        %v333 = vld [vmem:[#allocation5 + $0x8] sm:$0xf]
        %v334 = vld [vmem:[#allocation5 + $0xc] sm:$0xf]
        %v335 = vld [vmem:[#allocation5 + $0x10] sm:$0xf]
        %v336 = vld [vmem:[#allocation5 + $0x14] sm:$0xf]
        %v337 = vld [vmem:[#allocation5 + $0x18] sm:$0xf]
        %v338 = vld [vmem:[#allocation5 + $0x1c] sm:$0xf]
        %v339 = vld [vmem:[#allocation5 + $0x20] sm:$0xf]
        %v340 = vld [vmem:[#allocation5 + $0x24] sm:$0xf]
        %v341 = vld [vmem:[#allocation5 + $0x28] sm:$0xf]
        %v342 = vld [vmem:[#allocation5 + $0x2c] sm:$0xf]
        %v343 = vld [vmem:[#allocation5 + $0x30] sm:$0xf]
        %v344 = vld [vmem:[#allocation5 + $0x34] sm:$0xf]
        %v345 = vld [vmem:[#allocation5 + $0x38] sm:$0xf]
        %v346 = vld [vmem:[#allocation5 + $0x3c] sm:$0xf]
        %v347 = vld [vmem:[%s2] sm:$0x1]
        %v349 = vlaneseq
        %v350 = vshrl.u32 %v349, 7
        %v351 = vsub.s32 0, %v350
        %v352 = vrot.slane %v347, %v351
        %v356 = vunpack.c.l.b16 %v329
        %v357 = vunpack.c.l.b16 %v330
        %v358 = vpack.c.b16 %v357, %v356
        %v376 = vunpack.c.l.b16 %v331
        %v377 = vunpack.c.l.b16 %v332
        %v378 = vunpack.c.l.b16 %v333
        %v379 = vunpack.c.l.b16 %v334
        %v380 = vunpack.c.l.b16 %v335
        %v381 = vunpack.c.l.b16 %v336
        %v382 = vunpack.c.l.b16 %v337
        %v383 = vunpack.c.l.b16 %v338
        %v384 = vunpack.c.l.b16 %v339
        %v385 = vunpack.c.l.b16 %v340
        %v386 = vunpack.c.l.b16 %v341
        %v387 = vunpack.c.l.b16 %v342
        %v388 = vunpack.c.l.b16 %v343
        %v389 = vunpack.c.l.b16 %v344
        %v390 = vunpack.c.l.b16 %v345
        %v391 = vunpack.c.l.b16 %v346
        %v392 = vpack.c.b16 %v377, %v376
        %v393 = vpack.c.b16 %v379, %v378
        %v394 = vpack.c.b16 %v381, %v380
        %v395 = vpack.c.b16 %v383, %v382
        %v396 = vpack.c.b16 %v385, %v384
        %v397 = vpack.c.b16 %v387, %v386
        %v398 = vpack.c.b16 %v389, %v388
        %v399 = vpack.c.b16 %v391, %v390
        %408 = vmatprep.subr.bf16.mxu0 0
        %409 = vmatpush1.bf16.msra.mxu0 %v392
        %410 = vmatprep.subr.bf16.mxu0 0
        %411 = vmatpush1.bf16.msra.mxu0 %v393
        %412 = vmatprep.subr.bf16.mxu0 0
        %413 = vmatpush1.bf16.msra.mxu0 %v394
        %414 = vmatprep.subr.bf16.mxu0 0
        %415 = vmatpush1.bf16.msra.mxu0 %v395
        %416 = vmatprep.subr.bf16.mxu0 0
        %417 = vmatpush1.bf16.msra.mxu0 %v396
        %418 = vmatprep.subr.bf16.mxu0 0
        %419 = vmatpush1.bf16.msra.mxu0 %v397
        %420 = vmatprep.subr.bf16.mxu0 0
        %421 = vmatpush1.bf16.msra.mxu0 %v398
        %422 = vmatprep.subr.bf16.mxu0 0
        %423 = vmatpush1.bf16.msra.mxu0 %v399
        %424 = vmatprep.subr.bf16.mxu0 0
        %425 = vmatpush1.bf16.msra.mxu0 0
        %426 = vmatprep.subr.bf16.mxu0 0
        %427 = vmatpush1.bf16.msra.mxu0 0
        %428 = vmatprep.subr.bf16.mxu0 0
        %429 = vmatpush1.bf16.msra.mxu0 0
        %430 = vmatprep.subr.bf16.mxu0 0
        %431 = vmatpush1.bf16.msra.mxu0 0
        %432 = vmatprep.subr.bf16.mxu0 0
        %433 = vmatpush1.bf16.msra.mxu0 0
        %434 = vmatprep.subr.bf16.mxu0 0
        %435 = vmatpush1.bf16.msra.mxu0 0
        %436 = vmatprep.subr.bf16.mxu0 0
        %437 = vmatpush1.bf16.msra.mxu0 0
        %438 = vmatprep.subr.bf16.mxu0 0
        %439 = vmatpush1.bf16.msra.mxu0 0
        %440 = vmatprep.mubr.bf16.mxu0 0
        %441 = vmatmul.mubr.bf16.gmra.mrb[0].mxu0 %v358
        %v442 = vpop.f32.mrb[0].mxu0
        %v443 = vadd.f32 %v352, %v442
        %v444 = vpop.f32.mrb[0].mxu0
        %v445 = vpop.f32.mrb[0].mxu0
        %v446 = vadd.f32 %v352, %v445
        %v447 = vpop.f32.mrb[0].mxu0
        %448 = vdwg.mxu0
        %v449 = vmul.f32 %v443, 0.5
        %v450 = vmul.f32 %v446, 0.5
        %v451 = vmul.f32 %v443, 0.70710677
        %v452 = vmul.f32 %v446, 0.70710677
        %v453 = verf.f32.pop %v451
        %v454 = verf.f32.pop %v452
        %v455 = vadd.f32 %v453, 1.0
        %v456 = vadd.f32 %v454, 1.0
        %v457 = vmul.f32 %v449, %v455
        %v458 = vmul.f32 %v450, %v456
        %v459 = vpack.c.bf16 %v458, %v457
        %v460 = vld [vmem:[#allocation7] sm:$0xf]
        %v461 = vld [vmem:[#allocation7 + $0x4] sm:$0xf]
        %v462 = vld [vmem:[#allocation7 + $0x8] sm:$0xf]
        %v463 = vld [vmem:[#allocation7 + $0xc] sm:$0xf]
        %v464 = vld [vmem:[#allocation7 + $0x10] sm:$0xf]
        %v465 = vld [vmem:[#allocation7 + $0x14] sm:$0xf]
        %v466 = vld [vmem:[#allocation7 + $0x18] sm:$0xf]
        %v467 = vld [vmem:[#allocation7 + $0x1c] sm:$0xf]
        %v468 = vld [vmem:[#allocation7 + $0x20] sm:$0xf]
        %v469 = vld [vmem:[#allocation7 + $0x24] sm:$0xf]
        %v470 = vld [vmem:[#allocation7 + $0x28] sm:$0xf]
        %v471 = vld [vmem:[#allocation7 + $0x2c] sm:$0xf]
        %v472 = vld [vmem:[#allocation7 + $0x30] sm:$0xf]
        %v473 = vld [vmem:[#allocation7 + $0x34] sm:$0xf]
        %v474 = vld [vmem:[#allocation7 + $0x38] sm:$0xf]
        %v475 = vld [vmem:[#allocation7 + $0x3c] sm:$0xf]
        %v476 = vld [vmem:[%s4] sm:$0x1]
        %v478 = vlaneseq
        %v479 = vshrl.u32 %v478, 7
        %v480 = vsub.s32 0, %v479
        %v481 = vrot.slane %v476, %v480
        %v499 = vunpack.c.l.b16 %v460
        %v500 = vunpack.c.l.b16 %v461
        %v501 = vunpack.c.l.b16 %v462
        %v502 = vunpack.c.l.b16 %v463
        %v503 = vunpack.c.l.b16 %v464
        %v504 = vunpack.c.l.b16 %v465
        %v505 = vunpack.c.l.b16 %v466
        %v506 = vunpack.c.l.b16 %v467
        %v507 = vunpack.c.l.b16 %v468
        %v508 = vunpack.c.l.b16 %v469
        %v509 = vunpack.c.l.b16 %v470
        %v510 = vunpack.c.l.b16 %v471
        %v511 = vunpack.c.l.b16 %v472
        %v512 = vunpack.c.l.b16 %v473
        %v513 = vunpack.c.l.b16 %v474
        %v514 = vunpack.c.l.b16 %v475
        %v515 = vpack.c.b16 %v500, %v499
        %v516 = vpack.c.b16 %v502, %v501
        %v517 = vpack.c.b16 %v504, %v503
        %v518 = vpack.c.b16 %v506, %v505
        %v519 = vpack.c.b16 %v508, %v507
        %v520 = vpack.c.b16 %v510, %v509
        %v521 = vpack.c.b16 %v512, %v511
        %v522 = vpack.c.b16 %v514, %v513
        %531 = vmatprep.subr.bf16.mxu0 0
        %532 = vmatpush1.bf16.msra.mxu0 %v515
        %533 = vmatprep.subr.bf16.mxu0 0
        %534 = vmatpush1.bf16.msra.mxu0 %v516
        %535 = vmatprep.subr.bf16.mxu0 0
        %536 = vmatpush1.bf16.msra.mxu0 %v517
        %537 = vmatprep.subr.bf16.mxu0 0
        %538 = vmatpush1.bf16.msra.mxu0 %v518
        %539 = vmatprep.subr.bf16.mxu0 0
        %540 = vmatpush1.bf16.msra.mxu0 %v519
        %541 = vmatprep.subr.bf16.mxu0 0
        %542 = vmatpush1.bf16.msra.mxu0 %v520
        %543 = vmatprep.subr.bf16.mxu0 0
        %544 = vmatpush1.bf16.msra.mxu0 %v521
        %545 = vmatprep.subr.bf16.mxu0 0
        %546 = vmatpush1.bf16.msra.mxu0 %v522
        %547 = vmatprep.subr.bf16.mxu0 0
        %548 = vmatpush1.bf16.msra.mxu0 0
        %549 = vmatprep.subr.bf16.mxu0 0
        %550 = vmatpush1.bf16.msra.mxu0 0
        %551 = vmatprep.subr.bf16.mxu0 0
        %552 = vmatpush1.bf16.msra.mxu0 0
        %553 = vmatprep.subr.bf16.mxu0 0
        %554 = vmatpush1.bf16.msra.mxu0 0
        %555 = vmatprep.subr.bf16.mxu0 0
        %556 = vmatpush1.bf16.msra.mxu0 0
        %557 = vmatprep.subr.bf16.mxu0 0
        %558 = vmatpush1.bf16.msra.mxu0 0
        %559 = vmatprep.subr.bf16.mxu0 0
        %560 = vmatpush1.bf16.msra.mxu0 0
        %561 = vmatprep.subr.bf16.mxu0 0
        %562 = vmatpush1.bf16.msra.mxu0 0
        %563 = vmatprep.mubr.bf16.mxu0 0
        %564 = vmatmul.mubr.bf16.gmra.mrb[0].mxu0 %v459
        %v565 = vpop.f32.mrb[0].mxu0
        %v566 = vadd.f32 %v481, %v565
        %v567 = vpop.f32.mrb[0].mxu0
        %v568 = vpop.f32.mrb[0].mxu0
        %v569 = vadd.f32 %v481, %v568
        %v570 = vpop.f32.mrb[0].mxu0
        %571 = vdwg.mxu0
        %v572 = vadd.f32 %v566, %v443
        %v573 = vadd.f32 %v569, %v446
        %v574 = vld [vmem:[%s5] sm:$0x1]
        %v575 = vld [vmem:[%s6] sm:$0x1]
        %576 = vadd.xlane.f32.xlu0 %v572
        %v577 = vpop.xlane.xlu0 %576
        %578 = vadd.xlane.f32.xlu0 %v573
        %v579 = vpop.xlane.xlu0 %578
        %v580 = vrcp.pop 128.0
        %v581 = vmul.f32 %v577, %v580
        %v582 = vmul.f32 %v579, %v580
        %v583 = vsub.f32 %v572, %v581
        %v584 = vsub.f32 %v573, %v582
        %v585 = vmul.f32 %v583, %v583
        %v586 = vmul.f32 %v584, %v584
        %587 = vadd.xlane.f32.xlu0 %v585
        %v588 = vpop.xlane.xlu0 %587
        %589 = vadd.xlane.f32.xlu0 %v586
        %v590 = vpop.xlane.xlu0 %589
        %v591 = vmul.f32 %v588, %v580
        %v592 = vmul.f32 %v590, %v580
        %v593 = vadd.f32 %v591, 1e-05
        %v594 = vadd.f32 %v592, 1e-05
        %v595 = vrsqrt.pop %v593
        %v596 = vrsqrt.pop %v594
        %v597 = vmul.f32 %v583, %v595
        %v598 = vmul.f32 %v584, %v596
        %v600 = vlaneseq
        %v601 = vshrl.u32 %v600, 7
        %v602 = vsub.s32 0, %v601
        %v603 = vrot.slane %v574, %v602
        %v605 = vmul.f32 %v597, %v603
        %v606 = vmul.f32 %v598, %v603
        %v608 = vlaneseq
        %v609 = vshrl.u32 %v608, 7
        %v610 = vsub.s32 0, %v609
        %v611 = vrot.slane %v575, %v610
        %v613 = vadd.f32 %v605, %v611
        %v614 = vadd.f32 %v606, %v611
        %v615 = vpack.c.bf16 %v614, %v613
        %v617 = vunpack.c.l.b16 %v615
        %v618 = vunpack.c.h.b16 %v615
        %v619 = vpack.c.b16 %v617, %v617
        %v620 = vpack.c.b16 %v618, %v618
        %623 = vst [vmem:[%s325] sm:$0xf] %v619
        %624 = vst [vmem:[%s325 + $0x4] sm:$0xf] %v620
        %s625 = sand.u32 %s185, 1
        %s626 = scalar_lea.sflag [#allocation4], %s625
        %s627 = sand.u32 %s185, 1
        %s628 = smul.addr %s627, 8
        %s629 = scalar_lea.vmem [#allocation8], %s628
        // Predicated region
        $region61: #{tpu_custom_call.1} parent=47 // pred_check
          %p630 = pneg %p195
        $region62: #{tpu_custom_call.1} parent=47 // pred_check_branch
          %632 = sbr.rel (%p630) target = $region64
        $region63: #{tpu_custom_call.1} parent=47 // pred_region
          %s633 = smul.u32 2, %s25
          %s635 = ssub.s32 128, 128
          %636 = vsyncadd %s626, %s635
          %s637 = smul.addr %s633, 64
          %s638 = scalar_lea.hbm %s7, %s637
          %s639 = sshll.u32 %s629, 4
          %s640 = int_to_ptr.vmem [resolvable:$true] %s639
          %645 = dma.vmem_to_hbm [thread:$0]  %s640, 128, %s638, %s626, 64, 64, 4
        $region64: #{tpu_custom_call.1} parent=47 // pred_fallthru
          _
      $region48: #{tpu_custom_call.1} parent=5 // pred_fallthru
        _
      %p646 = scmp.le.s32.totalorder 2, %s20
      // Predicated region
      $region65: #{tpu_custom_call.1} parent=5 // pred_check
        %p647 = pneg %p646
      $region66: #{tpu_custom_call.1} parent=5 // pred_check_branch
        %649 = sbr.rel (%p647) target = $region68
      $region67: #{tpu_custom_call.1} parent=5 // pred_region
        %s650 = ssub.s32 %s20, 2
        // Predicated region
        $region69: #{tpu_custom_call.1} parent=67 // pred_check
          %p651 = pneg %p201
        $region70: #{tpu_custom_call.1} parent=67 // pred_check_branch
          %653 = sbr.rel (%p651) target = $region72
        $region71: #{tpu_custom_call.1} parent=67 // pred_region
          %s654 = sand.u32 %s186, 1
          %s655 = scalar_lea.sflag [#allocation4], %s654
          %s656 = sand.u32 %s186, 1
          %s657 = smul.addr %s656, 8
          %s658 = scalar_lea.vmem [#allocation8], %s657
          %659 = dma.done %s655, 128
        $region72: #{tpu_custom_call.1} parent=67 // pred_fallthru
          _
      $region68: #{tpu_custom_call.1} parent=5 // pred_fallthru
        _
    $region6: #{tpu_custom_call.1} parent=1 // loop_footer
      %s24 = sadd.s32 1, %s20
    $region7: #{tpu_custom_call.1} parent=1 // loop_footer_branch
      %19 = sbr.rel target = $region3
    $region8: #{tpu_custom_call.1} parent=1 // loop_exit
      _
    %660 = vsyncpa [#allocation3], 1
    %s661 = scalar_lea.sflag [#allocation3], 1
    %662 = vsyncpa %s661, 1
    %663 = vsyncpa [#allocation6], 1
    %664 = vsyncpa [#allocation4], 1
    %s665 = scalar_lea.sflag [#allocation4], 1
    %666 = vsyncpa %s665, 1

</llo_original>
